<compile_context>
chip_gen: v5e
topology: v5e:2x2
jax: 0.10.0
libtpu: 0.0.40
codegen_flags: <defaults>
</compile_context>

<pallas_src>
import functools

import jax
import jax.numpy as jnp
from jax.experimental import pallas as pl
from jax.experimental.pallas import tpu as pltpu


def _nrf_kernel(x_ref, w1_ref, b1_ref, w2_ref, p_ref, o_ref):
    # x_ref:  (TB, D)     batch tile (batch in sublanes, features in lanes)
    # w1_ref: (H, D)      layer-1 weight, torch layout, resident in VMEM
    # b1_ref: (H, 1)      layer-1 bias as a column, resident in VMEM
    # w2_ref: (H, 1)      layer-2 weight as a column, resident in VMEM
    # p_ref:  SMEM (3,)   packed scalars [b2, w3, b3]
    # o_ref:  (1, 1, TB)  lane-dense output row for this tile

    # Layer 1 on the MXU, batch-in-lanes: h1t[j, b] = sum_d W1[j, d] * x[b, d].
    h1t = jax.lax.dot_general(
        w1_ref[...], x_ref[...],
        dimension_numbers=(((1,), (1,)), ((), ())),
        preferred_element_type=jnp.float32,
    )                                                       # (H, TB)
    h1t = jax.nn.sigmoid(h1t + b1_ref[...])                 # b1 broadcasts over lanes

    # Layer 2 on VPU + XLU: broadcast-multiply by the (H,1) w2 column, then a
    # cross-sublane reduction over the H rows.
    acc = jnp.sum(h1t * w2_ref[...], axis=0, keepdims=True) + p_ref[0]   # (1, TB)
    h2 = jax.nn.sigmoid(acc)                                             # (1, TB)

    # Layer 3: scalar FMA on a lane-dense row.
    out = h2 * p_ref[1] + p_ref[2]                                       # (1, TB)
    o_ref[...] = out[None, :, :].astype(o_ref.dtype)                     # (1, 1, TB)


def _round_up(a, b):
    return (a + b - 1) // b * b


@functools.partial(jax.jit, static_argnames=("tb",))
def torch_nrf_forward(x, w1, b1, w2, b2, w3, b3, *, tb=16384):
    """TorchNRF forward.

    x:  (N, n_f*n_h) float32 (flattened exactly like the torch module).
    Parameters are in torch.nn.Linear layout:
      w1: (n_hidden, D), b1: (n_hidden,), w2: (1, n_hidden), b2: (1,),
      w3: (1, 1), b3: (1,).
    Returns (N, 1) float32.
    """
    n, d = x.shape
    h = w1.shape[0]

    # Lane-aligned batch tile, capped both by `tb` and so that the grid has at
    # least two blocks (keeps both v7x TensorCores busy; harmless on v5e/v6e).
    # No host-side padding: Pallas handles the partial last block and the
    # trailing [:n] slice discards its garbage rows.
    half = max(128, _round_up(pl.cdiv(n, 2), 128))
    tb_eff = min(_round_up(int(tb), 128), half)
    n_blk = pl.cdiv(n, tb_eff)

    x_f = x.astype(jnp.float32)                 # no-op for f32 input (no HBM copy)
    b1_col = b1.reshape(h, 1).astype(jnp.float32)
    w2_col = w2.reshape(h, 1).astype(jnp.float32)
    # Packed small scalars for SMEM: [b2, w3, b3].
    params = jnp.concatenate(
        [b2.reshape(-1), w3.reshape(-1), b3.reshape(-1)]
    ).astype(jnp.float32)

    # Scoped-VMEM budget: x is lane-padded to 128 lanes in VMEM, the output row
    # is sublane-padded to 8; both are double-buffered.  Raise the limit so the
    # large tile also fits v5e's 16 MiB scoped default (stays well under v7x's
    # 64 MiB physical VMEM).
    d_pad = _round_up(d, 128)
    vmem_needed = (2 * tb_eff * d_pad * 4            # x double-buffer
                   + 2 * 8 * tb_eff * 4              # output double-buffer
                   + 4 * _round_up(h, 8) * d_pad * 4  # W1/b1/w2 residents
                   + (2 << 20))                       # headroom
    vmem_limit = min(max(vmem_needed, 32 << 20), 48 << 20)

    out3 = pl.pallas_call(
        _nrf_kernel,
        out_shape=jax.ShapeDtypeStruct((n_blk, 1, tb_eff), jnp.float32),
        grid=(n_blk,),
        in_specs=[
            pl.BlockSpec((tb_eff, d), lambda i: (i, 0)),        # x batch tile
            pl.BlockSpec((h, d), lambda i: (0, 0)),             # W1 (resident)
            pl.BlockSpec((h, 1), lambda i: (0, 0)),             # b1 column
            pl.BlockSpec((h, 1), lambda i: (0, 0)),             # w2 column
            pl.BlockSpec(memory_space=pltpu.MemorySpace.SMEM),  # [b2, w3, b3]
        ],
        out_specs=pl.BlockSpec((1, 1, tb_eff), lambda i: (i, 0, 0)),
        compiler_params=pltpu.CompilerParams(
            dimension_semantics=("parallel",),
            vmem_limit_bytes=int(vmem_limit),
        ),
        cost_estimate=pl.CostEstimate(
            flops=2 * n * d * h,
            transcendentals=n * (h + 1),
            bytes_accessed=n * d * 4 + n * 4,
        ),
    )(x_f, w1.astype(jnp.float32), b1_col, w2_col, params)

    # Lane-dense (n_blk, 1, TB) -> (N, 1), dropping the partial-block tail.
    return out3.reshape(-1)[:n].reshape(n, 1)


def _reference_forward(x, w1, b1, w2, b2, w3, b3):
    h1 = jax.nn.sigmoid(x @ w1.T + b1)
    h2 = jax.nn.sigmoid(h1 @ w2.T + b2)
    return h2 @ w3.T + b3


if __name__ == "__main__":
    # Shapes consistent with the module's fit/predict usage:
    #   X: (n_t, n_f, n_h) -> flattened to (n_t, n_f*n_h)
    n_t, n_f, n_h = 3000, 4, 8        # batch (non tile-multiple), features, history
    n_hidden = 3                      # module default
    d = n_f * n_h

    key = jax.random.PRNGKey(0)
    kx, k1, kb1, k2, kb2, k3, kb3 = jax.random.split(key, 7)

    X = jax.random.normal(kx, (n_t, n_f, n_h), dtype=jnp.float32)
    x = X.reshape(n_t, d)             # same flattening as the torch module

    # Deterministic parameter init (torch.nn.Linear-like uniform scale),
    # stored in torch layout.
    def uinit(k, shape, fan_in):
        bound = 1.0 / jnp.sqrt(jnp.float32(fan_in))
        return jax.random.uniform(k, shape, jnp.float32, -bound, bound)

    w1 = uinit(k1, (n_hidden, d), d)         # linear1.weight
    b1 = uinit(kb1, (n_hidden,), d)          # linear1.bias
    w2 = uinit(k2, (1, n_hidden), n_hidden)  # linear2.weight
    b2 = uinit(kb2, (1,), n_hidden)          # linear2.bias
    w3 = uinit(k3, (1, 1), 1)                # linear3.weight
    b3 = uinit(kb3, (1,), 1)                 # linear3.bias

    out = torch_nrf_forward(x, w1, b1, w2, b2, w3, b3)
    out = jax.block_until_ready(out)

    ref = _reference_forward(x, w1, b1, w2, b2, w3, b3)
    assert out.shape == (n_t, 1)
    assert jnp.allclose(out, ref, atol=2e-5, rtol=2e-5), "mismatch vs reference"

    print("KERNEL_OK")
</pallas_src>

<mosaic_0001>
module attributes {stable_mosaic.version = 11 : i64} {
  func.func @_nrf_kernel(%arg0: i32, %arg1: memref<1536x32xf32, #tpu.memory_space<vmem>>, %arg2: memref<3x32xf32, #tpu.memory_space<vmem>>, %arg3: memref<3x1xf32, #tpu.memory_space<vmem>>, %arg4: memref<3x1xf32, #tpu.memory_space<vmem>>, %arg5: memref<3xf32, #tpu.memory_space<smem>>, %arg6: memref<1x1x1536xf32, #tpu.memory_space<vmem>>) attributes {dimension_semantics = [#tpu.dimension_semantics<parallel>], iteration_bounds = array<i64: 2>, scalar_prefetch = 0 : i64, scratch_operands = 0 : i64, tpu.core_type = #tpu.core_type<tc>, window_params = [{transform_indices = @transform_0, window_bounds = array<i64: 1536, 32>}, {pipeline_mode = #tpu.pipeline_mode<synchronous>, transform_indices = @transform_1, window_bounds = array<i64: 3, 32>}, {pipeline_mode = #tpu.pipeline_mode<synchronous>, transform_indices = @transform_2, window_bounds = array<i64: 3, 1>}, {pipeline_mode = #tpu.pipeline_mode<synchronous>, transform_indices = @transform_3, window_bounds = array<i64: 3, 1>}, {transform_indices = @transform_4, window_bounds = array<i64: 3>}, {transform_indices = @transform_5, window_bounds = array<i64: 1, 1, 1536>}]} {
    %c0 = arith.constant 0 : index
    %c0_0 = arith.constant 0 : index
    %0 = vector.load %arg2[%c0, %c0_0] : memref<3x32xf32, #tpu.memory_space<vmem>>, vector<3x32xf32>
    %c0_1 = arith.constant 0 : index
    %c0_2 = arith.constant 0 : index
    %1 = vector.load %arg1[%c0_1, %c0_2] : memref<1536x32xf32, #tpu.memory_space<vmem>>, vector<1536x32xf32>
    %cst = arith.constant dense<0.000000e+00> : vector<3x1536xf32>
    %2 = tpu.matmul %0, %1, %cst {dimension_numbers = #tpu.dot_dimension_numbers<[1], [1], [0], [0], [0, 0, 1, 0], [], []>} : vector<3x32xf32>, vector<1536x32xf32>, vector<3x1536xf32> -> vector<3x1536xf32>
    %c0_3 = arith.constant 0 : index
    %c0_4 = arith.constant 0 : index
    %3 = vector.load %arg3[%c0_3, %c0_4] : memref<3x1xf32, #tpu.memory_space<vmem>>, vector<3x1xf32>
    %4 = vector.broadcast %3 : vector<3x1xf32> to vector<3x1536xf32>
    %5 = arith.addf %2, %4 : vector<3x1536xf32>
    %6 = arith.negf %5 : vector<3x1536xf32>
    %7 = math.exp %6 : vector<3x1536xf32>
    %cst_5 = arith.constant 1.000000e+00 : f32
    %8 = vector.broadcast %cst_5 : f32 to vector<3x1536xf32>
    %9 = arith.addf %8, %7 : vector<3x1536xf32>
    %10 = arith.divf %8, %9 : vector<3x1536xf32>
    %c0_6 = arith.constant 0 : index
    %c0_7 = arith.constant 0 : index
    %11 = vector.load %arg4[%c0_6, %c0_7] : memref<3x1xf32, #tpu.memory_space<vmem>>, vector<3x1xf32>
    %12 = vector.broadcast %11 : vector<3x1xf32> to vector<3x1536xf32>
    %13 = arith.mulf %10, %12 : vector<3x1536xf32>
    %cst_8 = arith.constant dense<0.000000e+00> : vector<1536xf32>
    %14 = vector.multi_reduction <add>, %13, %cst_8 [0] : vector<3x1536xf32> to vector<1536xf32>
    %15 = vector.shape_cast %14 : vector<1536xf32> to vector<1x1536xf32>
    %c0_9 = arith.constant 0 : index
    %16 = memref.load %arg5[%c0_9] : memref<3xf32, #tpu.memory_space<smem>>
    %17 = vector.broadcast %16 : f32 to vector<1x1536xf32>
    %18 = arith.addf %15, %17 : vector<1x1536xf32>
    %19 = arith.negf %18 : vector<1x1536xf32>
    %20 = math.exp %19 : vector<1x1536xf32>
    %cst_10 = arith.constant 1.000000e+00 : f32
    %21 = vector.broadcast %cst_10 : f32 to vector<1x1536xf32>
    %22 = arith.addf %21, %20 : vector<1x1536xf32>
    %23 = arith.divf %21, %22 : vector<1x1536xf32>
    %c1 = arith.constant 1 : index
    %24 = memref.load %arg5[%c1] : memref<3xf32, #tpu.memory_space<smem>>
    %25 = vector.broadcast %24 : f32 to vector<1x1536xf32>
    %26 = arith.mulf %23, %25 : vector<1x1536xf32>
    %c2 = arith.constant 2 : index
    %27 = memref.load %arg5[%c2] : memref<3xf32, #tpu.memory_space<smem>>
    %28 = vector.broadcast %27 : f32 to vector<1x1536xf32>
    %29 = arith.addf %26, %28 : vector<1x1536xf32>
    %30 = vector.shape_cast %29 : vector<1x1536xf32> to vector<1x1x1536xf32>
    %c0_11 = arith.constant 0 : index
    %c0_12 = arith.constant 0 : index
    %c0_13 = arith.constant 0 : index
    %31 = vector.load %arg6[%c0_11, %c0_12, %c0_13] : memref<1x1x1536xf32, #tpu.memory_space<vmem>>, vector<1x1x1536xf32>
    tpu.vector_store %arg6[%c0_11, %c0_12, %c0_13], %30 {strides = array<i32>} : memref<1x1x1536xf32, #tpu.memory_space<vmem>>, vector<1x1x1536xf32>,
    return
  }
  func.func @transform_0(%arg0: i32) -> (i32, i32) {
    %c0_i32 = arith.constant 0 : i32
    %c0_i32_0 = arith.constant 0 : i32
    return %arg0, %c0_i32 : i32, i32
  }
  func.func @transform_1(%arg0: i32) -> (i32, i32) {
    %c0_i32 = arith.constant 0 : i32
    %c0_i32_0 = arith.constant 0 : i32
    %c0_i32_1 = arith.constant 0 : i32
    return %c0_i32, %c0_i32_0 : i32, i32
  }
  func.func @transform_2(%arg0: i32) -> (i32, i32) {
    %c0_i32 = arith.constant 0 : i32
    %c0_i32_0 = arith.constant 0 : i32
    %c0_i32_1 = arith.constant 0 : i32
    return %c0_i32, %c0_i32_0 : i32, i32
  }
  func.func @transform_3(%arg0: i32) -> (i32, i32) {
    %c0_i32 = arith.constant 0 : i32
    %c0_i32_0 = arith.constant 0 : i32
    %c0_i32_1 = arith.constant 0 : i32
    return %c0_i32, %c0_i32_0 : i32, i32
  }
  func.func @transform_4(%arg0: i32) -> i32 {
    %c0_i32 = arith.constant 0 : i32
    %c0_i32_0 = arith.constant 0 : i32
    return %c0_i32 : i32
  }
  func.func @transform_5(%arg0: i32) -> (i32, i32, i32) {
    %c0_i32 = arith.constant 0 : i32
    %c0_i32_0 = arith.constant 0 : i32
    %c0_i32_1 = arith.constant 0 : i32
    return %arg0, %c0_i32, %c0_i32_0 : i32, i32, i32
  }
}

</mosaic_0001>

<llo_original>
// kernel: torch_nrf_forward.1
$region0: #{torch_nrf_forward.1}
  #allocation0 [shape = 'u32[]', space=smem, size = 0x4, offset = 0x4, fixed_abs, tag = 'smem constant byte address 0x4 - core index']
  #allocation1 [shape = 'u32[72,128]{1,0:T(1,128)}', space=vmem, size = 0x9000, scoped, tag = 'internal scratch']
  %s0 = inlined_call_operand.vmem [shape: f32[3000,32], index: 0, kind: input, shape index: {}]
  %s1 = inlined_call_operand.vmem [shape: f32[3,32], index: 1, kind: input, shape index: {}]
  %s2 = inlined_call_operand.vmem [shape: f32[3,1], index: 2, kind: input, shape index: {}]
  %s3 = inlined_call_operand.vmem [shape: f32[3,1], index: 3, kind: input, shape index: {}]
  %s4 = inlined_call_operand.vmem [shape: f32[3], index: 4, kind: input, shape index: {}]
  %s5 = inlined_call_operand.hbm [shape: f32[2,1,1536], index: 5, kind: output, shape index: {}]
  %s6 = sld [smem:[#allocation0]]
  $region57: #{torch_nrf_forward.1} parent=0
    _
  %s8 = ssub.s32 1, %s6
  %s9 = scalar_select 0, %s8, %s6
  $region1: #{torch_nrf_forward.1} parent=0
    #allocation2 [shape = 'u8[512]{0}', space=smem, size = 0x200, scoped, tag = 'input window, operand 4, single buffered']
    #allocation3 [shape = 's32[2]{0}', space=sflag, size = 0x8, scoped, tag = 'scoped memory for torch_nrf_forward.1']
    #allocation4 [shape = 's32[2]{0}', space=sflag, size = 0x8, scoped, tag = 'scoped memory for torch_nrf_forward.1']
    #allocation5 [shape = 'u8[12288]{0}', space=vmem, size = 0x3000, scoped, tag = 'output window, operand 0']
    %10 = vsyncpa [#allocation4], 0
    %11 = vsyncpa [#allocation3], 0
    %s12 = scalar_lea.sflag [#allocation3], 1
    %13 = vsyncpa %s12, 0
    loop: start=0, step=1, limit=4
    $region2: #{torch_nrf_forward.1} parent=1 // loop_pre_header
      _
    $region3: #{torch_nrf_forward.1} parent=1 // loop_header
      %s15 = sphi 0, %s19
      %p16 = scmp.ge.s32.totalorder %s15, 4
      %s25 = sphi 0, %s27
      %s28 = sphi 0, %s25
      %s29 = sphi 0, %s28
      %s45 = sphi 0, %s29
      %s49 = sphi 0, %s49
      %s51 = sphi 0, %s49
      %s52 = sphi 0, %s51
      %s66 = sphi 0, %s52
      %s70 = sphi 0, %s70
      %s72 = sphi 0, %s70
      %s73 = sphi 0, %s72
      %s87 = sphi 0, %s73
      %s91 = sphi 0, %s91
      %s93 = sphi 0, %s91
      %s94 = sphi 0, %s93
      %s108 = sphi 0, %s94
      %s112 = sphi 0, %s112
      %s114 = sphi 0, %s112
      %s115 = sphi 0, %s114
      %s129 = sphi 0, %s115
      %s135 = sphi 0, %s137
      %s138 = sphi 0, %s135
      %s139 = sphi 0, %s138
      %s155 = sphi 0, %s139
    $region4: #{torch_nrf_forward.1} parent=1 // loop_header_branch
      %18 = sbr.rel (%p16) target = $region8
    $region5: #{torch_nrf_forward.1} parent=1 // loop_body
      %s20 = ssub.s32 %s15, 1
      %s21 = ssub.s32 %s15, 2
      %s22 = sadd.s32 %s15, 1
      %s23 = ssub.s32 %s15, %s22
      %p24 = scmp.eq.s32.totalorder %s23, 0
      %s26 = sadd.s32 %s25, 1
      %s27 = scalar_select %p24, %s25, %s26
      %p30 = pneg %p24
      %p31 = scmp.eq.s32.totalorder %s15, 1
      %p32 = por %p30, %p31
      %p33 = scmp.ne.s32.totalorder %s25, %s28
      %p34 = scmp.eq.s32.totalorder %s15, 0
      %p35 = por %p33, %p34
      %p36 = scmp.ne.s32.totalorder %s25, %s28
      %p37 = scmp.eq.s32.totalorder %s20, 1
      %p38 = por %p36, %p37
      %p39 = scmp.ne.s32.totalorder %s28, %s29
      %p40 = scmp.eq.s32.totalorder %s20, 0
      %p41 = por %p39, %p40
      %p42 = scmp.ne.s32.totalorder %s28, %s29
      %p43 = scmp.eq.s32.totalorder %s21, 1
      %p44 = por %p42, %p43
      %p46 = scmp.ne.s32.totalorder %s29, %s45
      %p47 = scmp.eq.s32.totalorder %s21, 0
      %p48 = por %p46, %p47
      %s50 = sadd.s32 %s49, 1
      %p53 = scmp.eq.s32.totalorder %s15, 1
      %p54 = scmp.ne.s32.totalorder %s49, %s51
      %p55 = scmp.eq.s32.totalorder %s15, 0
      %p56 = por %p54, %p55
      %p57 = scmp.ne.s32.totalorder %s49, %s51
      %p58 = scmp.eq.s32.totalorder %s20, 1
      %p59 = por %p57, %p58
      %p60 = scmp.ne.s32.totalorder %s51, %s52
      %p61 = scmp.eq.s32.totalorder %s20, 0
      %p62 = por %p60, %p61
      %p63 = scmp.ne.s32.totalorder %s51, %s52
      %p64 = scmp.eq.s32.totalorder %s21, 1
      %p65 = por %p63, %p64
      %p67 = scmp.ne.s32.totalorder %s52, %s66
      %p68 = scmp.eq.s32.totalorder %s21, 0
      %p69 = por %p67, %p68
      %s71 = sadd.s32 %s70, 1
      %p74 = scmp.eq.s32.totalorder %s15, 1
      %p75 = scmp.ne.s32.totalorder %s70, %s72
      %p76 = scmp.eq.s32.totalorder %s15, 0
      %p77 = por %p75, %p76
      %p78 = scmp.ne.s32.totalorder %s70, %s72
      %p79 = scmp.eq.s32.totalorder %s20, 1
      %p80 = por %p78, %p79
      %p81 = scmp.ne.s32.totalorder %s72, %s73
      %p82 = scmp.eq.s32.totalorder %s20, 0
      %p83 = por %p81, %p82
      %p84 = scmp.ne.s32.totalorder %s72, %s73
      %p85 = scmp.eq.s32.totalorder %s21, 1
      %p86 = por %p84, %p85
      %p88 = scmp.ne.s32.totalorder %s73, %s87
      %p89 = scmp.eq.s32.totalorder %s21, 0
      %p90 = por %p88, %p89
      %s92 = sadd.s32 %s91, 1
      %p95 = scmp.eq.s32.totalorder %s15, 1
      %p96 = scmp.ne.s32.totalorder %s91, %s93
      %p97 = scmp.eq.s32.totalorder %s15, 0
      %p98 = por %p96, %p97
      %p99 = scmp.ne.s32.totalorder %s91, %s93
      %p100 = scmp.eq.s32.totalorder %s20, 1
      %p101 = por %p99, %p100
      %p102 = scmp.ne.s32.totalorder %s93, %s94
      %p103 = scmp.eq.s32.totalorder %s20, 0
      %p104 = por %p102, %p103
      %p105 = scmp.ne.s32.totalorder %s93, %s94
      %p106 = scmp.eq.s32.totalorder %s21, 1
      %p107 = por %p105, %p106
      %p109 = scmp.ne.s32.totalorder %s94, %s108
      %p110 = scmp.eq.s32.totalorder %s21, 0
      %p111 = por %p109, %p110
      %s113 = sadd.s32 %s112, 1
      %p116 = scmp.eq.s32.totalorder %s15, 1
      %p117 = scmp.ne.s32.totalorder %s112, %s114
      %p118 = scmp.eq.s32.totalorder %s15, 0
      %p119 = por %p117, %p118
      %p120 = scmp.ne.s32.totalorder %s112, %s114
      %p121 = scmp.eq.s32.totalorder %s20, 1
      %p122 = por %p120, %p121
      %p123 = scmp.ne.s32.totalorder %s114, %s115
      %p124 = scmp.eq.s32.totalorder %s20, 0
      %p125 = por %p123, %p124
      %p126 = scmp.ne.s32.totalorder %s114, %s115
      %p127 = scmp.eq.s32.totalorder %s21, 1
      %p128 = por %p126, %p127
      %p130 = scmp.ne.s32.totalorder %s115, %s129
      %p131 = scmp.eq.s32.totalorder %s21, 0
      %p132 = por %p130, %p131
      %s133 = ssub.s32 %s15, %s22
      %p134 = scmp.eq.s32.totalorder %s133, 0
      %s136 = sadd.s32 %s135, 1
      %s137 = scalar_select %p134, %s135, %s136
      %p140 = pneg %p134
      %p141 = scmp.eq.s32.totalorder %s15, 1
      %p142 = por %p140, %p141
      %p143 = scmp.ne.s32.totalorder %s135, %s138
      %p144 = scmp.eq.s32.totalorder %s15, 0
      %p145 = por %p143, %p144
      %p146 = scmp.ne.s32.totalorder %s135, %s138
      %p147 = scmp.eq.s32.totalorder %s20, 1
      %p148 = por %p146, %p147
      %p149 = scmp.ne.s32.totalorder %s138, %s139
      %p150 = scmp.eq.s32.totalorder %s20, 0
      %p151 = por %p149, %p150
      %p152 = scmp.ne.s32.totalorder %s138, %s139
      %p153 = scmp.eq.s32.totalorder %s21, 1
      %p154 = por %p152, %p153
      %p156 = scmp.ne.s32.totalorder %s139, %s155
      %p157 = scmp.eq.s32.totalorder %s21, 0
      %p158 = por %p156, %p157
      %p159 = scmp.le.s32.totalorder 1, %s15
      %p160 = scmp.lt.s32.totalorder %s15, 3
      %p161 = pnand %p159, %p160
      %p162 = pneg %p161
      // Predicated region
      $region9: #{torch_nrf_forward.1} parent=5 // pred_check
        _
      $region10: #{torch_nrf_forward.1} parent=5 // pred_check_branch
        %164 = sbr.rel (%p161) target = $region12
      $region11: #{torch_nrf_forward.1} parent=5 // pred_region
        %s165 = ssub.s32 %s15, 1
        // Predicated region
        $region13: #{torch_nrf_forward.1} parent=11 // pred_check
          %p166 = pneg %p62
        $region14: #{torch_nrf_forward.1} parent=11 // pred_check_branch
          %168 = sbr.rel (%p166) target = $region16
        $region15: #{torch_nrf_forward.1} parent=11 // pred_region
          _
        $region16: #{torch_nrf_forward.1} parent=11 // pred_fallthru
          _
        // Predicated region
        $region17: #{torch_nrf_forward.1} parent=11 // pred_check
          %p169 = pneg %p83
        $region18: #{torch_nrf_forward.1} parent=11 // pred_check_branch
          %171 = sbr.rel (%p169) target = $region20
        $region19: #{torch_nrf_forward.1} parent=11 // pred_region
          _
        $region20: #{torch_nrf_forward.1} parent=11 // pred_fallthru
          _
        // Predicated region
        $region21: #{torch_nrf_forward.1} parent=11 // pred_check
          %p172 = pneg %p104
        $region22: #{torch_nrf_forward.1} parent=11 // pred_check_branch
          %174 = sbr.rel (%p172) target = $region24
        $region23: #{torch_nrf_forward.1} parent=11 // pred_region
          _
        $region24: #{torch_nrf_forward.1} parent=11 // pred_fallthru
          _
        // Predicated region
        $region25: #{torch_nrf_forward.1} parent=11 // pred_check
          %p175 = pneg %p125
        $region26: #{torch_nrf_forward.1} parent=11 // pred_check_branch
          %177 = sbr.rel (%p175) target = $region28
        $region27: #{torch_nrf_forward.1} parent=11 // pred_region
          %179 = vsyncadd [#allocation4], 0
          %s181 = sshll.u32 %s4, 4
          %s182 = int_to_ptr.vmem [resolvable:$true] %s181
          %184 = dma.vmem_to_smem %s182, 16, [#allocation2], [#allocation4]
        $region28: #{torch_nrf_forward.1} parent=11 // pred_fallthru
          _
      $region12: #{torch_nrf_forward.1} parent=5 // pred_fallthru
        _
      %p185 = scmp.lt.s32.totalorder %s15, 2
      // Predicated region
      $region29: #{torch_nrf_forward.1} parent=5 // pred_check
        %p186 = pneg %p185
      $region30: #{torch_nrf_forward.1} parent=5 // pred_check_branch
        %188 = sbr.rel (%p186) target = $region32
      $region31: #{torch_nrf_forward.1} parent=5 // pred_region
        // Predicated region
        $region33: #{torch_nrf_forward.1} parent=31 // pred_check
          %p189 = pneg %p35
        $region34: #{torch_nrf_forward.1} parent=31 // pred_check_branch
          %191 = sbr.rel (%p189) target = $region36
        $region35: #{torch_nrf_forward.1} parent=31 // pred_region
          %s192 = smul.u32 192, %s15
          %s193 = ssub.s32 375, %s192
          %p194 = scmp.lt.s32.totalorder %s193, 192
          %s195 = scalar_select %p194, %s193, 192
          %s196 = smul.u32 8, %s195
          %p197 = scmp.lt.s32.totalorder %s192, 374
          %s198 = scalar_select %p197, %s192, 374
          %s199 = smul.addr %s198, 8
          %s200 = scalar_lea.vmem %s0, %s199
          %s201 = smul.u32 192, %s15
          %s202 = ssub.s32 375, %s201
          %p203 = scmp.lt.s32.totalorder %s202, 192
          %s204 = scalar_select %p203, %s202, 192
          %s205 = smul.u32 8, %s204
        $region36: #{torch_nrf_forward.1} parent=31 // pred_fallthru
          _
      $region32: #{torch_nrf_forward.1} parent=5 // pred_fallthru
        _
      %p206 = scmp.le.s32.totalorder 1, %s15
      %p207 = scmp.lt.s32.totalorder %s15, 3
      %p208 = pnand %p206, %p207
      %p209 = pneg %p208
      // Predicated region
      $region37: #{torch_nrf_forward.1} parent=5 // pred_check
        _
      $region38: #{torch_nrf_forward.1} parent=5 // pred_check_branch
        %211 = sbr.rel (%p208) target = $region40
      $region39: #{torch_nrf_forward.1} parent=5 // pred_region
        %s212 = ssub.s32 %s15, 1
        // Predicated region
        $region41: #{torch_nrf_forward.1} parent=39 // pred_check
          %p213 = pneg %p125
        $region42: #{torch_nrf_forward.1} parent=39 // pred_check_branch
          %215 = sbr.rel (%p213) target = $region44
        $region43: #{torch_nrf_forward.1} parent=39 // pred_region
          %217 = dma.done [#allocation4], 16
        $region44: #{torch_nrf_forward.1} parent=39 // pred_fallthru
          _
        %218 = sfence
        %s219 = smul.u32 192, %s20
        %s220 = ssub.s32 375, %s219
        %p221 = scmp.lt.s32.totalorder %s220, 192
        %s222 = scalar_select %p221, %s220, 192
        %s223 = smul.u32 8, %s222
        %p224 = scmp.lt.s32.totalorder %s219, 374
        %s225 = scalar_select %p224, %s219, 374
        %s226 = smul.addr %s225, 8
        %s227 = scalar_lea.vmem %s0, %s226
        %p228 = pneg %p41
        %p229 = pneg %p38
        %p230 = pneg %p62
        %p231 = pneg %p59
        %p232 = pneg %p83
        %p233 = pneg %p80
        %p234 = pneg %p104
        %p235 = pneg %p101
        %p236 = pneg %p125
        %p237 = pneg %p122
        %p238 = pneg %p151
        %p239 = pneg %p148
        %s240 = sand.u32 %s138, 1
        %s241 = scalar_lea.sflag [#allocation3], %s240
        %s242 = sand.u32 %s138, 1
        %s243 = smul.addr %s242, 12
        %s244 = scalar_lea.vmem [#allocation5], %s243
        %s245 = smul.u32 192, %s20
        %s246 = ssub.s32 375, %s245
        %p247 = scmp.lt.s32.totalorder %s246, 192
        %s248 = scalar_select %p247, %s246, 192
        %s249 = smul.u32 8, %s248
        %p250 = scmp.lt.s32.totalorder %s245, 374
        %s251 = scalar_select %p250, %s245, 374
        %s252 = smul.addr %s251, 8
        %s253 = scalar_lea.vmem %s0, %s252
        %s254 = smul.u32 192, %s20
        %s255 = ssub.s32 375, %s254
        %p256 = scmp.lt.s32.totalorder %s255, 192
        %s257 = scalar_select %p256, %s255, 192
        %s258 = smul.u32 8, %s257
        %v259 = vld [vmem:[%s1] sm:$0x7]
        %v260 = vld [vmem:[%s253] sm:$0xff]
        %v261 = vld [vmem:[%s253 + $0x8] sm:$0xff]
        %v262 = vld [vmem:[%s253 + $0x10] sm:$0xff]
        %v263 = vld [vmem:[%s253 + $0x18] sm:$0xff]
        %v264 = vld [vmem:[%s253 + $0x20] sm:$0xff]
        %v265 = vld [vmem:[%s253 + $0x28] sm:$0xff]
        %v266 = vld [vmem:[%s253 + $0x30] sm:$0xff]
        %v267 = vld [vmem:[%s253 + $0x38] sm:$0xff]
        %v268 = vld [vmem:[%s253 + $0x40] sm:$0xff]
        %v269 = vld [vmem:[%s253 + $0x48] sm:$0xff]
        %v270 = vld [vmem:[%s253 + $0x50] sm:$0xff]
        %v271 = vld [vmem:[%s253 + $0x58] sm:$0xff]
        %v272 = vld [vmem:[%s253 + $0x60] sm:$0xff]
        %v273 = vld [vmem:[%s253 + $0x68] sm:$0xff]
        %v274 = vld [vmem:[%s253 + $0x70] sm:$0xff]
        %v275 = vld [vmem:[%s253 + $0x78] sm:$0xff]
        %v276 = vld [vmem:[%s253 + $0x80] sm:$0xff]
        %v277 = vld [vmem:[%s253 + $0x88] sm:$0xff]
        %v278 = vld [vmem:[%s253 + $0x90] sm:$0xff]
        %v279 = vld [vmem:[%s253 + $0x98] sm:$0xff]
        %v280 = vld [vmem:[%s253 + $0xa0] sm:$0xff]
        %v281 = vld [vmem:[%s253 + $0xa8] sm:$0xff]
        %v282 = vld [vmem:[%s253 + $0xb0] sm:$0xff]
        %v283 = vld [vmem:[%s253 + $0xb8] sm:$0xff]
        %v284 = vld [vmem:[%s253 + $0xc0] sm:$0xff]
        %v285 = vld [vmem:[%s253 + $0xc8] sm:$0xff]
        %v286 = vld [vmem:[%s253 + $0xd0] sm:$0xff]
        %v287 = vld [vmem:[%s253 + $0xd8] sm:$0xff]
        %v288 = vld [vmem:[%s253 + $0xe0] sm:$0xff]
        %v289 = vld [vmem:[%s253 + $0xe8] sm:$0xff]
        %v290 = vld [vmem:[%s253 + $0xf0] sm:$0xff]
        %v291 = vld [vmem:[%s253 + $0xf8] sm:$0xff]
        %v292 = vld [vmem:[%s253 + $0x100] sm:$0xff]
        %v293 = vld [vmem:[%s253 + $0x108] sm:$0xff]
        %v294 = vld [vmem:[%s253 + $0x110] sm:$0xff]
        %v295 = vld [vmem:[%s253 + $0x118] sm:$0xff]
        %v296 = vld [vmem:[%s253 + $0x120] sm:$0xff]
        %v297 = vld [vmem:[%s253 + $0x128] sm:$0xff]
        %v298 = vld [vmem:[%s253 + $0x130] sm:$0xff]
        %v299 = vld [vmem:[%s253 + $0x138] sm:$0xff]
        %v300 = vld [vmem:[%s253 + $0x140] sm:$0xff]
        %v301 = vld [vmem:[%s253 + $0x148] sm:$0xff]
        %v302 = vld [vmem:[%s253 + $0x150] sm:$0xff]
        %v303 = vld [vmem:[%s253 + $0x158] sm:$0xff]
        %v304 = vld [vmem:[%s253 + $0x160] sm:$0xff]
        %v305 = vld [vmem:[%s253 + $0x168] sm:$0xff]
        %v306 = vld [vmem:[%s253 + $0x170] sm:$0xff]
        %v307 = vld [vmem:[%s253 + $0x178] sm:$0xff]
        %v308 = vld [vmem:[%s253 + $0x180] sm:$0xff]
        %v309 = vld [vmem:[%s253 + $0x188] sm:$0xff]
        %v310 = vld [vmem:[%s253 + $0x190] sm:$0xff]
        %v311 = vld [vmem:[%s253 + $0x198] sm:$0xff]
        %v312 = vld [vmem:[%s253 + $0x1a0] sm:$0xff]
        %v313 = vld [vmem:[%s253 + $0x1a8] sm:$0xff]
        %v314 = vld [vmem:[%s253 + $0x1b0] sm:$0xff]
        %v315 = vld [vmem:[%s253 + $0x1b8] sm:$0xff]
        %v316 = vld [vmem:[%s253 + $0x1c0] sm:$0xff]
        %v317 = vld [vmem:[%s253 + $0x1c8] sm:$0xff]
        %v318 = vld [vmem:[%s253 + $0x1d0] sm:$0xff]
        %v319 = vld [vmem:[%s253 + $0x1d8] sm:$0xff]
        %v320 = vld [vmem:[%s253 + $0x1e0] sm:$0xff]
        %v321 = vld [vmem:[%s253 + $0x1e8] sm:$0xff]
        %v322 = vld [vmem:[%s253 + $0x1f0] sm:$0xff]
        %v323 = vld [vmem:[%s253 + $0x1f8] sm:$0xff]
        %v324 = vld [vmem:[%s253 + $0x200] sm:$0xff]
        %v325 = vld [vmem:[%s253 + $0x208] sm:$0xff]
        %v326 = vld [vmem:[%s253 + $0x210] sm:$0xff]
        %v327 = vld [vmem:[%s253 + $0x218] sm:$0xff]
        %v328 = vld [vmem:[%s253 + $0x220] sm:$0xff]
        %v329 = vld [vmem:[%s253 + $0x228] sm:$0xff]
        %v330 = vld [vmem:[%s253 + $0x230] sm:$0xff]
        %v331 = vld [vmem:[%s253 + $0x238] sm:$0xff]
        %v332 = vld [vmem:[%s253 + $0x240] sm:$0xff]
        %v333 = vld [vmem:[%s253 + $0x248] sm:$0xff]
        %v334 = vld [vmem:[%s253 + $0x250] sm:$0xff]
        %v335 = vld [vmem:[%s253 + $0x258] sm:$0xff]
        %v336 = vld [vmem:[%s253 + $0x260] sm:$0xff]
        %v337 = vld [vmem:[%s253 + $0x268] sm:$0xff]
        %v338 = vld [vmem:[%s253 + $0x270] sm:$0xff]
        %v339 = vld [vmem:[%s253 + $0x278] sm:$0xff]
        %v340 = vld [vmem:[%s253 + $0x280] sm:$0xff]
        %v341 = vld [vmem:[%s253 + $0x288] sm:$0xff]
        %v342 = vld [vmem:[%s253 + $0x290] sm:$0xff]
        %v343 = vld [vmem:[%s253 + $0x298] sm:$0xff]
        %v344 = vld [vmem:[%s253 + $0x2a0] sm:$0xff]
        %v345 = vld [vmem:[%s253 + $0x2a8] sm:$0xff]
        %v346 = vld [vmem:[%s253 + $0x2b0] sm:$0xff]
        %v347 = vld [vmem:[%s253 + $0x2b8] sm:$0xff]
        %v348 = vld [vmem:[%s253 + $0x2c0] sm:$0xff]
        %v349 = vld [vmem:[%s253 + $0x2c8] sm:$0xff]
        %v350 = vld [vmem:[%s253 + $0x2d0] sm:$0xff]
        %v351 = vld [vmem:[%s253 + $0x2d8] sm:$0xff]
        %v352 = vld [vmem:[%s253 + $0x2e0] sm:$0xff]
        %v353 = vld [vmem:[%s253 + $0x2e8] sm:$0xff]
        %v354 = vld [vmem:[%s253 + $0x2f0] sm:$0xff]
        %v355 = vld [vmem:[%s253 + $0x2f8] sm:$0xff]
        %v356 = vld [vmem:[%s253 + $0x300] sm:$0xff]
        %v357 = vld [vmem:[%s253 + $0x308] sm:$0xff]
        %v358 = vld [vmem:[%s253 + $0x310] sm:$0xff]
        %v359 = vld [vmem:[%s253 + $0x318] sm:$0xff]
        %v360 = vld [vmem:[%s253 + $0x320] sm:$0xff]
        %v361 = vld [vmem:[%s253 + $0x328] sm:$0xff]
        %v362 = vld [vmem:[%s253 + $0x330] sm:$0xff]
        %v363 = vld [vmem:[%s253 + $0x338] sm:$0xff]
        %v364 = vld [vmem:[%s253 + $0x340] sm:$0xff]
        %v365 = vld [vmem:[%s253 + $0x348] sm:$0xff]
        %v366 = vld [vmem:[%s253 + $0x350] sm:$0xff]
        %v367 = vld [vmem:[%s253 + $0x358] sm:$0xff]
        %v368 = vld [vmem:[%s253 + $0x360] sm:$0xff]
        %v369 = vld [vmem:[%s253 + $0x368] sm:$0xff]
        %v370 = vld [vmem:[%s253 + $0x370] sm:$0xff]
        %v371 = vld [vmem:[%s253 + $0x378] sm:$0xff]
        %v372 = vld [vmem:[%s253 + $0x380] sm:$0xff]
        %v373 = vld [vmem:[%s253 + $0x388] sm:$0xff]
        %v374 = vld [vmem:[%s253 + $0x390] sm:$0xff]
        %v375 = vld [vmem:[%s253 + $0x398] sm:$0xff]
        %v376 = vld [vmem:[%s253 + $0x3a0] sm:$0xff]
        %v377 = vld [vmem:[%s253 + $0x3a8] sm:$0xff]
        %v378 = vld [vmem:[%s253 + $0x3b0] sm:$0xff]
        %v379 = vld [vmem:[%s253 + $0x3b8] sm:$0xff]
        %v380 = vld [vmem:[%s253 + $0x3c0] sm:$0xff]
        %v381 = vld [vmem:[%s253 + $0x3c8] sm:$0xff]
        %v382 = vld [vmem:[%s253 + $0x3d0] sm:$0xff]
        %v383 = vld [vmem:[%s253 + $0x3d8] sm:$0xff]
        %v384 = vld [vmem:[%s253 + $0x3e0] sm:$0xff]
        %v385 = vld [vmem:[%s253 + $0x3e8] sm:$0xff]
        %v386 = vld [vmem:[%s253 + $0x3f0] sm:$0xff]
        %v387 = vld [vmem:[%s253 + $0x3f8] sm:$0xff]
        %v388 = vld [vmem:[%s253 + $0x400] sm:$0xff]
        %v389 = vld [vmem:[%s253 + $0x408] sm:$0xff]
        %v390 = vld [vmem:[%s253 + $0x410] sm:$0xff]
        %v391 = vld [vmem:[%s253 + $0x418] sm:$0xff]
        %v392 = vld [vmem:[%s253 + $0x420] sm:$0xff]
        %v393 = vld [vmem:[%s253 + $0x428] sm:$0xff]
        %v394 = vld [vmem:[%s253 + $0x430] sm:$0xff]
        %v395 = vld [vmem:[%s253 + $0x438] sm:$0xff]
        %v396 = vld [vmem:[%s253 + $0x440] sm:$0xff]
        %v397 = vld [vmem:[%s253 + $0x448] sm:$0xff]
        %v398 = vld [vmem:[%s253 + $0x450] sm:$0xff]
        %v399 = vld [vmem:[%s253 + $0x458] sm:$0xff]
        %v400 = vld [vmem:[%s253 + $0x460] sm:$0xff]
        %v401 = vld [vmem:[%s253 + $0x468] sm:$0xff]
        %v402 = vld [vmem:[%s253 + $0x470] sm:$0xff]
        %v403 = vld [vmem:[%s253 + $0x478] sm:$0xff]
        %v404 = vld [vmem:[%s253 + $0x480] sm:$0xff]
        %v405 = vld [vmem:[%s253 + $0x488] sm:$0xff]
        %v406 = vld [vmem:[%s253 + $0x490] sm:$0xff]
        %v407 = vld [vmem:[%s253 + $0x498] sm:$0xff]
        %v408 = vld [vmem:[%s253 + $0x4a0] sm:$0xff]
        %v409 = vld [vmem:[%s253 + $0x4a8] sm:$0xff]
        %v410 = vld [vmem:[%s253 + $0x4b0] sm:$0xff]
        %v411 = vld [vmem:[%s253 + $0x4b8] sm:$0xff]
        %v412 = vld [vmem:[%s253 + $0x4c0] sm:$0xff]
        %v413 = vld [vmem:[%s253 + $0x4c8] sm:$0xff]
        %v414 = vld [vmem:[%s253 + $0x4d0] sm:$0xff]
        %v415 = vld [vmem:[%s253 + $0x4d8] sm:$0xff]
        %v416 = vld [vmem:[%s253 + $0x4e0] sm:$0xff]
        %v417 = vld [vmem:[%s253 + $0x4e8] sm:$0xff]
        %v418 = vld [vmem:[%s253 + $0x4f0] sm:$0xff]
        %v419 = vld [vmem:[%s253 + $0x4f8] sm:$0xff]
        %v420 = vld [vmem:[%s253 + $0x500] sm:$0xff]
        %v421 = vld [vmem:[%s253 + $0x508] sm:$0xff]
        %v422 = vld [vmem:[%s253 + $0x510] sm:$0xff]
        %v423 = vld [vmem:[%s253 + $0x518] sm:$0xff]
        %v424 = vld [vmem:[%s253 + $0x520] sm:$0xff]
        %v425 = vld [vmem:[%s253 + $0x528] sm:$0xff]
        %v426 = vld [vmem:[%s253 + $0x530] sm:$0xff]
        %v427 = vld [vmem:[%s253 + $0x538] sm:$0xff]
        %v428 = vld [vmem:[%s253 + $0x540] sm:$0xff]
        %v429 = vld [vmem:[%s253 + $0x548] sm:$0xff]
        %v430 = vld [vmem:[%s253 + $0x550] sm:$0xff]
        %v431 = vld [vmem:[%s253 + $0x558] sm:$0xff]
        %v432 = vld [vmem:[%s253 + $0x560] sm:$0xff]
        %v433 = vld [vmem:[%s253 + $0x568] sm:$0xff]
        %v434 = vld [vmem:[%s253 + $0x570] sm:$0xff]
        %v435 = vld [vmem:[%s253 + $0x578] sm:$0xff]
        %v436 = vld [vmem:[%s253 + $0x580] sm:$0xff]
        %v437 = vld [vmem:[%s253 + $0x588] sm:$0xff]
        %v438 = vld [vmem:[%s253 + $0x590] sm:$0xff]
        %v439 = vld [vmem:[%s253 + $0x598] sm:$0xff]
        %v440 = vld [vmem:[%s253 + $0x5a0] sm:$0xff]
        %v441 = vld [vmem:[%s253 + $0x5a8] sm:$0xff]
        %v442 = vld [vmem:[%s253 + $0x5b0] sm:$0xff]
        %v443 = vld [vmem:[%s253 + $0x5b8] sm:$0xff]
        %v444 = vld [vmem:[%s253 + $0x5c0] sm:$0xff]
        %v445 = vld [vmem:[%s253 + $0x5c8] sm:$0xff]
        %v446 = vld [vmem:[%s253 + $0x5d0] sm:$0xff]
        %v447 = vld [vmem:[%s253 + $0x5d8] sm:$0xff]
        %v448 = vld [vmem:[%s253 + $0x5e0] sm:$0xff]
        %v449 = vld [vmem:[%s253 + $0x5e8] sm:$0xff]
        %v450 = vld [vmem:[%s253 + $0x5f0] sm:$0xff]
        %v451 = vld [vmem:[%s253 + $0x5f8] sm:$0xff]
        %v452 = vld [vmem:[%s2] sm:$0x7]
        %454 = vset.pattern.permute.xlu0 0
        %455 = vperm.xlu0 %454, %v452
        %v456 = vpop.permute.xlu0 %455
        %vm458 = vcmask 261120
        %v460 = vsel %vm458, %v259, 0
        %v463 = vsel %vm458, %v260, 0
        %v466 = vsel %vm458, %v261, 0
        %v469 = vsel %vm458, %v262, 0
        %v472 = vsel %vm458, %v263, 0
        %v475 = vsel %vm458, %v264, 0
        %v478 = vsel %vm458, %v265, 0
        %v481 = vsel %vm458, %v266, 0
        %v484 = vsel %vm458, %v267, 0
        %v487 = vsel %vm458, %v268, 0
        %v490 = vsel %vm458, %v269, 0
        %v493 = vsel %vm458, %v270, 0
        %v496 = vsel %vm458, %v271, 0
        %v499 = vsel %vm458, %v272, 0
        %v502 = vsel %vm458, %v273, 0
        %v505 = vsel %vm458, %v274, 0
        %v508 = vsel %vm458, %v275, 0
        %v511 = vsel %vm458, %v276, 0
        %v514 = vsel %vm458, %v277, 0
        %v517 = vsel %vm458, %v278, 0
        %v520 = vsel %vm458, %v279, 0
        %v523 = vsel %vm458, %v280, 0
        %v526 = vsel %vm458, %v281, 0
        %v529 = vsel %vm458, %v282, 0
        %v532 = vsel %vm458, %v283, 0
        %v535 = vsel %vm458, %v284, 0
        %v538 = vsel %vm458, %v285, 0
        %v541 = vsel %vm458, %v286, 0
        %v544 = vsel %vm458, %v287, 0
        %v547 = vsel %vm458, %v288, 0
        %v550 = vsel %vm458, %v289, 0
        %v553 = vsel %vm458, %v290, 0
        %v556 = vsel %vm458, %v291, 0
        %v559 = vsel %vm458, %v292, 0
        %v562 = vsel %vm458, %v293, 0
        %v565 = vsel %vm458, %v294, 0
        %v568 = vsel %vm458, %v295, 0
        %v571 = vsel %vm458, %v296, 0
        %v574 = vsel %vm458, %v297, 0
        %v577 = vsel %vm458, %v298, 0
        %v580 = vsel %vm458, %v299, 0
        %v583 = vsel %vm458, %v300, 0
        %v586 = vsel %vm458, %v301, 0
        %v589 = vsel %vm458, %v302, 0
        %v592 = vsel %vm458, %v303, 0
        %v595 = vsel %vm458, %v304, 0
        %v598 = vsel %vm458, %v305, 0
        %v601 = vsel %vm458, %v306, 0
        %v604 = vsel %vm458, %v307, 0
        %v607 = vsel %vm458, %v308, 0
        %v610 = vsel %vm458, %v309, 0
        %v613 = vsel %vm458, %v310, 0
        %v616 = vsel %vm458, %v311, 0
        %v619 = vsel %vm458, %v312, 0
        %v622 = vsel %vm458, %v313, 0
        %v625 = vsel %vm458, %v314, 0
        %v628 = vsel %vm458, %v315, 0
        %v631 = vsel %vm458, %v316, 0
        %v634 = vsel %vm458, %v317, 0
        %v637 = vsel %vm458, %v318, 0
        %v640 = vsel %vm458, %v319, 0
        %v643 = vsel %vm458, %v320, 0
        %v646 = vsel %vm458, %v321, 0
        %v649 = vsel %vm458, %v322, 0
        %v652 = vsel %vm458, %v323, 0
        %v655 = vsel %vm458, %v324, 0
        %v658 = vsel %vm458, %v325, 0
        %v661 = vsel %vm458, %v326, 0
        %v664 = vsel %vm458, %v327, 0
        %v667 = vsel %vm458, %v328, 0
        %v670 = vsel %vm458, %v329, 0
        %v673 = vsel %vm458, %v330, 0
        %v676 = vsel %vm458, %v331, 0
        %v679 = vsel %vm458, %v332, 0
        %v682 = vsel %vm458, %v333, 0
        %v685 = vsel %vm458, %v334, 0
        %v688 = vsel %vm458, %v335, 0
        %v691 = vsel %vm458, %v336, 0
        %v694 = vsel %vm458, %v337, 0
        %v697 = vsel %vm458, %v338, 0
        %v700 = vsel %vm458, %v339, 0
        %v703 = vsel %vm458, %v340, 0
        %v706 = vsel %vm458, %v341, 0
        %v709 = vsel %vm458, %v342, 0
        %v712 = vsel %vm458, %v343, 0
        %v715 = vsel %vm458, %v344, 0
        %v718 = vsel %vm458, %v345, 0
        %v721 = vsel %vm458, %v346, 0
        %v724 = vsel %vm458, %v347, 0
        %v727 = vsel %vm458, %v348, 0
        %v730 = vsel %vm458, %v349, 0
        %v733 = vsel %vm458, %v350, 0
        %v736 = vsel %vm458, %v351, 0
        %v739 = vsel %vm458, %v352, 0
        %v742 = vsel %vm458, %v353, 0
        %v745 = vsel %vm458, %v354, 0
        %v748 = vsel %vm458, %v355, 0
        %v751 = vsel %vm458, %v356, 0
        %v754 = vsel %vm458, %v357, 0
        %v757 = vsel %vm458, %v358, 0
        %v760 = vsel %vm458, %v359, 0
        %v763 = vsel %vm458, %v360, 0
        %v766 = vsel %vm458, %v361, 0
        %v769 = vsel %vm458, %v362, 0
        %v772 = vsel %vm458, %v363, 0
        %v775 = vsel %vm458, %v364, 0
        %v778 = vsel %vm458, %v365, 0
        %v781 = vsel %vm458, %v366, 0
        %v784 = vsel %vm458, %v367, 0
        %v787 = vsel %vm458, %v368, 0
        %v790 = vsel %vm458, %v369, 0
        %v793 = vsel %vm458, %v370, 0
        %v796 = vsel %vm458, %v371, 0
        %v799 = vsel %vm458, %v372, 0
        %v802 = vsel %vm458, %v373, 0
        %v805 = vsel %vm458, %v374, 0
        %v808 = vsel %vm458, %v375, 0
        %v811 = vsel %vm458, %v376, 0
        %v814 = vsel %vm458, %v377, 0
        %v817 = vsel %vm458, %v378, 0
        %v820 = vsel %vm458, %v379, 0
        %v823 = vsel %vm458, %v380, 0
        %v826 = vsel %vm458, %v381, 0
        %v829 = vsel %vm458, %v382, 0
        %v832 = vsel %vm458, %v383, 0
        %v835 = vsel %vm458, %v384, 0
        %v838 = vsel %vm458, %v385, 0
        %v841 = vsel %vm458, %v386, 0
        %v844 = vsel %vm458, %v387, 0
        %v847 = vsel %vm458, %v388, 0
        %v850 = vsel %vm458, %v389, 0
        %v853 = vsel %vm458, %v390, 0
        %v856 = vsel %vm458, %v391, 0
        %v859 = vsel %vm458, %v392, 0
        %v862 = vsel %vm458, %v393, 0
        %v865 = vsel %vm458, %v394, 0
        %v868 = vsel %vm458, %v395, 0
        %v871 = vsel %vm458, %v396, 0
        %v874 = vsel %vm458, %v397, 0
        %v877 = vsel %vm458, %v398, 0
        %v880 = vsel %vm458, %v399, 0
        %v883 = vsel %vm458, %v400, 0
        %v886 = vsel %vm458, %v401, 0
        %v889 = vsel %vm458, %v402, 0
        %v892 = vsel %vm458, %v403, 0
        %v895 = vsel %vm458, %v404, 0
        %v898 = vsel %vm458, %v405, 0
        %v901 = vsel %vm458, %v406, 0
        %v904 = vsel %vm458, %v407, 0
        %v907 = vsel %vm458, %v408, 0
        %v910 = vsel %vm458, %v409, 0
        %v913 = vsel %vm458, %v410, 0
        %v916 = vsel %vm458, %v411, 0
        %v919 = vsel %vm458, %v412, 0
        %v922 = vsel %vm458, %v413, 0
        %v925 = vsel %vm458, %v414, 0
        %v928 = vsel %vm458, %v415, 0
        %v931 = vsel %vm458, %v416, 0
        %v934 = vsel %vm458, %v417, 0
        %v937 = vsel %vm458, %v418, 0
        %v940 = vsel %vm458, %v419, 0
        %v943 = vsel %vm458, %v420, 0
        %v946 = vsel %vm458, %v421, 0
        %v949 = vsel %vm458, %v422, 0
        %v952 = vsel %vm458, %v423, 0
        %v955 = vsel %vm458, %v424, 0
        %v958 = vsel %vm458, %v425, 0
        %v961 = vsel %vm458, %v426, 0
        %v964 = vsel %vm458, %v427, 0
        %v967 = vsel %vm458, %v428, 0
        %v970 = vsel %vm458, %v429, 0
        %v973 = vsel %vm458, %v430, 0
        %v976 = vsel %vm458, %v431, 0
        %v979 = vsel %vm458, %v432, 0
        %v982 = vsel %vm458, %v433, 0
        %v985 = vsel %vm458, %v434, 0
        %v988 = vsel %vm458, %v435, 0
        %v991 = vsel %vm458, %v436, 0
        %v994 = vsel %vm458, %v437, 0
        %v997 = vsel %vm458, %v438, 0
        %v1000 = vsel %vm458, %v439, 0
        %v1003 = vsel %vm458, %v440, 0
        %v1006 = vsel %vm458, %v441, 0
        %v1009 = vsel %vm458, %v442, 0
        %v1012 = vsel %vm458, %v443, 0
        %v1015 = vsel %vm458, %v444, 0
        %v1018 = vsel %vm458, %v445, 0
        %v1021 = vsel %vm458, %v446, 0
        %v1024 = vsel %vm458, %v447, 0
        %v1027 = vsel %vm458, %v448, 0
        %v1030 = vsel %vm458, %v449, 0
        %v1033 = vsel %vm458, %v450, 0
        %v1036 = vsel %vm458, %v451, 0
        %1038 = vmatpush.xpose.msra.mxu0 %v508
        %1039 = vmatpush.xpose.msra.mxu0 %v505
        %1040 = vmatpush.xpose.msra.mxu0 %v502
        %1041 = vmatpush.xpose.msra.mxu0 %v499
        %1042 = vmatpush.xpose.msra.mxu0 %v496
        %1043 = vmatpush.xpose.msra.mxu0 %v493
        %1044 = vmatpush.xpose.msra.mxu0 %v490
        %1045 = vmatpush.xpose.msra.mxu0 %v487
        %1046 = vmatpush.xpose.msra.mxu0 %v484
        %1047 = vmatpush.xpose.msra.mxu0 %v481
        %1048 = vmatpush.xpose.msra.mxu0 %v478
        %1049 = vmatpush.xpose.msra.mxu0 %v475
        %1050 = vmatpush.xpose.msra.mxu0 %v472
        %1051 = vmatpush.xpose.msra.mxu0 %v469
        %1052 = vmatpush.xpose.msra.mxu0 %v466
        %1053 = vmatpush.xpose.msra.mxu0 %v463
        %1054 = vmatmul.f32.gmra.mxu0 %v460
        %v1055 = vpop.f32.mrf.mxu0
        %v1056 = vadd.f32 %v456, %v1055
        %1057 = vdwg.mxu0
        %1058 = vmatpush.xpose.msra.mxu0 %v556
        %1059 = vmatpush.xpose.msra.mxu0 %v553
        %1060 = vmatpush.xpose.msra.mxu0 %v550
        %1061 = vmatpush.xpose.msra.mxu0 %v547
        %1062 = vmatpush.xpose.msra.mxu0 %v544
        %1063 = vmatpush.xpose.msra.mxu0 %v541
        %1064 = vmatpush.xpose.msra.mxu0 %v538
        %1065 = vmatpush.xpose.msra.mxu0 %v535
        %1066 = vmatpush.xpose.msra.mxu0 %v532
        %1067 = vmatpush.xpose.msra.mxu0 %v529
        %1068 = vmatpush.xpose.msra.mxu0 %v526
        %1069 = vmatpush.xpose.msra.mxu0 %v523
        %1070 = vmatpush.xpose.msra.mxu0 %v520
        %1071 = vmatpush.xpose.msra.mxu0 %v517
        %1072 = vmatpush.xpose.msra.mxu0 %v514
        %1073 = vmatpush.xpose.msra.mxu0 %v511
        %1074 = vmatmul.f32.gmra.mxu0 %v460
        %v1075 = vpop.f32.mrf.mxu0
        %v1076 = vadd.f32 %v456, %v1075
        %1077 = vdwg.mxu0
        %1078 = vmatpush.xpose.msra.mxu0 %v604
        %1079 = vmatpush.xpose.msra.mxu0 %v601
        %1080 = vmatpush.xpose.msra.mxu0 %v598
        %1081 = vmatpush.xpose.msra.mxu0 %v595
        %1082 = vmatpush.xpose.msra.mxu0 %v592
        %1083 = vmatpush.xpose.msra.mxu0 %v589
        %1084 = vmatpush.xpose.msra.mxu0 %v586
        %1085 = vmatpush.xpose.msra.mxu0 %v583
        %1086 = vmatpush.xpose.msra.mxu0 %v580
        %1087 = vmatpush.xpose.msra.mxu0 %v577
        %1088 = vmatpush.xpose.msra.mxu0 %v574
        %1089 = vmatpush.xpose.msra.mxu0 %v571
        %1090 = vmatpush.xpose.msra.mxu0 %v568
        %1091 = vmatpush.xpose.msra.mxu0 %v565
        %1092 = vmatpush.xpose.msra.mxu0 %v562
        %1093 = vmatpush.xpose.msra.mxu0 %v559
        %1094 = vmatmul.f32.gmra.mxu0 %v460
        %v1095 = vpop.f32.mrf.mxu0
        %v1096 = vadd.f32 %v456, %v1095
        %1097 = vdwg.mxu0
        %1098 = vmatpush.xpose.msra.mxu0 %v652
        %1099 = vmatpush.xpose.msra.mxu0 %v649
        %1100 = vmatpush.xpose.msra.mxu0 %v646
        %1101 = vmatpush.xpose.msra.mxu0 %v643
        %1102 = vmatpush.xpose.msra.mxu0 %v640
        %1103 = vmatpush.xpose.msra.mxu0 %v637
        %1104 = vmatpush.xpose.msra.mxu0 %v634
        %1105 = vmatpush.xpose.msra.mxu0 %v631
        %1106 = vmatpush.xpose.msra.mxu0 %v628
        %1107 = vmatpush.xpose.msra.mxu0 %v625
        %1108 = vmatpush.xpose.msra.mxu0 %v622
        %1109 = vmatpush.xpose.msra.mxu0 %v619
        %1110 = vmatpush.xpose.msra.mxu0 %v616
        %1111 = vmatpush.xpose.msra.mxu0 %v613
        %1112 = vmatpush.xpose.msra.mxu0 %v610
        %1113 = vmatpush.xpose.msra.mxu0 %v607
        %1114 = vmatmul.f32.gmra.mxu0 %v460
        %v1115 = vpop.f32.mrf.mxu0
        %v1116 = vadd.f32 %v456, %v1115
        %1117 = vdwg.mxu0
        %1118 = vmatpush.xpose.msra.mxu0 %v700
        %1119 = vmatpush.xpose.msra.mxu0 %v697
        %1120 = vmatpush.xpose.msra.mxu0 %v694
        %1121 = vmatpush.xpose.msra.mxu0 %v691
        %1122 = vmatpush.xpose.msra.mxu0 %v688
        %1123 = vmatpush.xpose.msra.mxu0 %v685
        %1124 = vmatpush.xpose.msra.mxu0 %v682
        %1125 = vmatpush.xpose.msra.mxu0 %v679
        %1126 = vmatpush.xpose.msra.mxu0 %v676
        %1127 = vmatpush.xpose.msra.mxu0 %v673
        %1128 = vmatpush.xpose.msra.mxu0 %v670
        %1129 = vmatpush.xpose.msra.mxu0 %v667
        %1130 = vmatpush.xpose.msra.mxu0 %v664
        %1131 = vmatpush.xpose.msra.mxu0 %v661
        %1132 = vmatpush.xpose.msra.mxu0 %v658
        %1133 = vmatpush.xpose.msra.mxu0 %v655
        %1134 = vmatmul.f32.gmra.mxu0 %v460
        %v1135 = vpop.f32.mrf.mxu0
        %v1136 = vadd.f32 %v456, %v1135
        %1137 = vdwg.mxu0
        %1138 = vmatpush.xpose.msra.mxu0 %v748
        %1139 = vmatpush.xpose.msra.mxu0 %v745
        %1140 = vmatpush.xpose.msra.mxu0 %v742
        %1141 = vmatpush.xpose.msra.mxu0 %v739
        %1142 = vmatpush.xpose.msra.mxu0 %v736
        %1143 = vmatpush.xpose.msra.mxu0 %v733
        %1144 = vmatpush.xpose.msra.mxu0 %v730
        %1145 = vmatpush.xpose.msra.mxu0 %v727
        %1146 = vmatpush.xpose.msra.mxu0 %v724
        %1147 = vmatpush.xpose.msra.mxu0 %v721
        %1148 = vmatpush.xpose.msra.mxu0 %v718
        %1149 = vmatpush.xpose.msra.mxu0 %v715
        %1150 = vmatpush.xpose.msra.mxu0 %v712
        %1151 = vmatpush.xpose.msra.mxu0 %v709
        %1152 = vmatpush.xpose.msra.mxu0 %v706
        %1153 = vmatpush.xpose.msra.mxu0 %v703
        %1154 = vmatmul.f32.gmra.mxu0 %v460
        %v1155 = vpop.f32.mrf.mxu0
        %v1156 = vadd.f32 %v456, %v1155
        %1157 = vdwg.mxu0
        %1158 = vmatpush.xpose.msra.mxu0 %v796
        %1159 = vmatpush.xpose.msra.mxu0 %v793
        %1160 = vmatpush.xpose.msra.mxu0 %v790
        %1161 = vmatpush.xpose.msra.mxu0 %v787
        %1162 = vmatpush.xpose.msra.mxu0 %v784
        %1163 = vmatpush.xpose.msra.mxu0 %v781
        %1164 = vmatpush.xpose.msra.mxu0 %v778
        %1165 = vmatpush.xpose.msra.mxu0 %v775
        %1166 = vmatpush.xpose.msra.mxu0 %v772
        %1167 = vmatpush.xpose.msra.mxu0 %v769
        %1168 = vmatpush.xpose.msra.mxu0 %v766
        %1169 = vmatpush.xpose.msra.mxu0 %v763
        %1170 = vmatpush.xpose.msra.mxu0 %v760
        %1171 = vmatpush.xpose.msra.mxu0 %v757
        %1172 = vmatpush.xpose.msra.mxu0 %v754
        %1173 = vmatpush.xpose.msra.mxu0 %v751
        %1174 = vmatmul.f32.gmra.mxu0 %v460
        %v1175 = vpop.f32.mrf.mxu0
        %v1176 = vadd.f32 %v456, %v1175
        %1177 = vdwg.mxu0
        %1178 = vmatpush.xpose.msra.mxu0 %v844
        %1179 = vmatpush.xpose.msra.mxu0 %v841
        %1180 = vmatpush.xpose.msra.mxu0 %v838
        %1181 = vmatpush.xpose.msra.mxu0 %v835
        %1182 = vmatpush.xpose.msra.mxu0 %v832
        %1183 = vmatpush.xpose.msra.mxu0 %v829
        %1184 = vmatpush.xpose.msra.mxu0 %v826
        %1185 = vmatpush.xpose.msra.mxu0 %v823
        %1186 = vmatpush.xpose.msra.mxu0 %v820
        %1187 = vmatpush.xpose.msra.mxu0 %v817
        %1188 = vmatpush.xpose.msra.mxu0 %v814
        %1189 = vmatpush.xpose.msra.mxu0 %v811
        %1190 = vmatpush.xpose.msra.mxu0 %v808
        %1191 = vmatpush.xpose.msra.mxu0 %v805
        %1192 = vmatpush.xpose.msra.mxu0 %v802
        %1193 = vmatpush.xpose.msra.mxu0 %v799
        %1194 = vmatmul.f32.gmra.mxu0 %v460
        %v1195 = vpop.f32.mrf.mxu0
        %v1196 = vadd.f32 %v456, %v1195
        %1197 = vdwg.mxu0
        %1198 = vmatpush.xpose.msra.mxu0 %v892
        %1199 = vmatpush.xpose.msra.mxu0 %v889
        %1200 = vmatpush.xpose.msra.mxu0 %v886
        %1201 = vmatpush.xpose.msra.mxu0 %v883
        %1202 = vmatpush.xpose.msra.mxu0 %v880
        %1203 = vmatpush.xpose.msra.mxu0 %v877
        %1204 = vmatpush.xpose.msra.mxu0 %v874
        %1205 = vmatpush.xpose.msra.mxu0 %v871
        %1206 = vmatpush.xpose.msra.mxu0 %v868
        %1207 = vmatpush.xpose.msra.mxu0 %v865
        %1208 = vmatpush.xpose.msra.mxu0 %v862
        %1209 = vmatpush.xpose.msra.mxu0 %v859
        %1210 = vmatpush.xpose.msra.mxu0 %v856
        %1211 = vmatpush.xpose.msra.mxu0 %v853
        %1212 = vmatpush.xpose.msra.mxu0 %v850
        %1213 = vmatpush.xpose.msra.mxu0 %v847
        %1214 = vmatmul.f32.gmra.mxu0 %v460
        %v1215 = vpop.f32.mrf.mxu0
        %v1216 = vadd.f32 %v456, %v1215
        %1217 = vdwg.mxu0
        %1218 = vmatpush.xpose.msra.mxu0 %v940
        %1219 = vmatpush.xpose.msra.mxu0 %v937
        %1220 = vmatpush.xpose.msra.mxu0 %v934
        %1221 = vmatpush.xpose.msra.mxu0 %v931
        %1222 = vmatpush.xpose.msra.mxu0 %v928
        %1223 = vmatpush.xpose.msra.mxu0 %v925
        %1224 = vmatpush.xpose.msra.mxu0 %v922
        %1225 = vmatpush.xpose.msra.mxu0 %v919
        %1226 = vmatpush.xpose.msra.mxu0 %v916
        %1227 = vmatpush.xpose.msra.mxu0 %v913
        %1228 = vmatpush.xpose.msra.mxu0 %v910
        %1229 = vmatpush.xpose.msra.mxu0 %v907
        %1230 = vmatpush.xpose.msra.mxu0 %v904
        %1231 = vmatpush.xpose.msra.mxu0 %v901
        %1232 = vmatpush.xpose.msra.mxu0 %v898
        %1233 = vmatpush.xpose.msra.mxu0 %v895
        %1234 = vmatmul.f32.gmra.mxu0 %v460
        %v1235 = vpop.f32.mrf.mxu0
        %v1236 = vadd.f32 %v456, %v1235
        %1237 = vdwg.mxu0
        %1238 = vmatpush.xpose.msra.mxu0 %v988
        %1239 = vmatpush.xpose.msra.mxu0 %v985
        %1240 = vmatpush.xpose.msra.mxu0 %v982
        %1241 = vmatpush.xpose.msra.mxu0 %v979
        %1242 = vmatpush.xpose.msra.mxu0 %v976
        %1243 = vmatpush.xpose.msra.mxu0 %v973
        %1244 = vmatpush.xpose.msra.mxu0 %v970
        %1245 = vmatpush.xpose.msra.mxu0 %v967
        %1246 = vmatpush.xpose.msra.mxu0 %v964
        %1247 = vmatpush.xpose.msra.mxu0 %v961
        %1248 = vmatpush.xpose.msra.mxu0 %v958
        %1249 = vmatpush.xpose.msra.mxu0 %v955
        %1250 = vmatpush.xpose.msra.mxu0 %v952
        %1251 = vmatpush.xpose.msra.mxu0 %v949
        %1252 = vmatpush.xpose.msra.mxu0 %v946
        %1253 = vmatpush.xpose.msra.mxu0 %v943
        %1254 = vmatmul.f32.gmra.mxu0 %v460
        %v1255 = vpop.f32.mrf.mxu0
        %v1256 = vadd.f32 %v456, %v1255
        %1257 = vdwg.mxu0
        %1258 = vmatpush.xpose.msra.mxu0 %v1036
        %1259 = vmatpush.xpose.msra.mxu0 %v1033
        %1260 = vmatpush.xpose.msra.mxu0 %v1030
        %1261 = vmatpush.xpose.msra.mxu0 %v1027
        %1262 = vmatpush.xpose.msra.mxu0 %v1024
        %1263 = vmatpush.xpose.msra.mxu0 %v1021
        %1264 = vmatpush.xpose.msra.mxu0 %v1018
        %1265 = vmatpush.xpose.msra.mxu0 %v1015
        %1266 = vmatpush.xpose.msra.mxu0 %v1012
        %1267 = vmatpush.xpose.msra.mxu0 %v1009
        %1268 = vmatpush.xpose.msra.mxu0 %v1006
        %1269 = vmatpush.xpose.msra.mxu0 %v1003
        %1270 = vmatpush.xpose.msra.mxu0 %v1000
        %1271 = vmatpush.xpose.msra.mxu0 %v997
        %1272 = vmatpush.xpose.msra.mxu0 %v994
        %1273 = vmatpush.xpose.msra.mxu0 %v991
        %1274 = vmatmul.f32.gmra.mxu0 %v460
        %v1275 = vpop.f32.mrf.mxu0
        %v1276 = vadd.f32 %v456, %v1275
        %1277 = vdwg.mxu0
        %v1278 = vxor.u32 %v1056, 2147483648
        %v1279 = vxor.u32 %v1076, 2147483648
        %v1280 = vxor.u32 %v1096, 2147483648
        %v1281 = vxor.u32 %v1116, 2147483648
        %v1282 = vxor.u32 %v1136, 2147483648
        %v1283 = vxor.u32 %v1156, 2147483648
        %v1284 = vxor.u32 %v1176, 2147483648
        %v1285 = vxor.u32 %v1196, 2147483648
        %v1286 = vxor.u32 %v1216, 2147483648
        %v1287 = vxor.u32 %v1236, 2147483648
        %v1288 = vxor.u32 %v1256, 2147483648
        %v1289 = vxor.u32 %v1276, 2147483648
        %v1290 = vmul.f32 %v1278, 1.442695
        %v1291 = vpow.pop %v1290
        %v1292 = vmul.f32 %v1279, 1.442695
        %v1293 = vpow.pop %v1292
        %v1294 = vmul.f32 %v1280, 1.442695
        %v1295 = vpow.pop %v1294
        %v1296 = vmul.f32 %v1281, 1.442695
        %v1297 = vpow.pop %v1296
        %v1298 = vmul.f32 %v1282, 1.442695
        %v1299 = vpow.pop %v1298
        %v1300 = vmul.f32 %v1283, 1.442695
        %v1301 = vpow.pop %v1300
        %v1302 = vmul.f32 %v1284, 1.442695
        %v1303 = vpow.pop %v1302
        %v1304 = vmul.f32 %v1285, 1.442695
        %v1305 = vpow.pop %v1304
        %v1306 = vmul.f32 %v1286, 1.442695
        %v1307 = vpow.pop %v1306
        %v1308 = vmul.f32 %v1287, 1.442695
        %v1309 = vpow.pop %v1308
        %v1310 = vmul.f32 %v1288, 1.442695
        %v1311 = vpow.pop %v1310
        %v1312 = vmul.f32 %v1289, 1.442695
        %v1313 = vpow.pop %v1312
        %v1314 = vadd.f32 %v1291, 1.0
        %v1315 = vadd.f32 %v1293, 1.0
        %v1316 = vadd.f32 %v1295, 1.0
        %v1317 = vadd.f32 %v1297, 1.0
        %v1318 = vadd.f32 %v1299, 1.0
        %v1319 = vadd.f32 %v1301, 1.0
        %v1320 = vadd.f32 %v1303, 1.0
        %v1321 = vadd.f32 %v1305, 1.0
        %v1322 = vadd.f32 %v1307, 1.0
        %v1323 = vadd.f32 %v1309, 1.0
        %v1324 = vadd.f32 %v1311, 1.0
        %v1325 = vadd.f32 %v1313, 1.0
        %v1326 = vrcp.pop %v1314
        %v1327 = vmul.f32 %v1314, %v1326
        %v1328 = vsub.f32 1.0, %v1327
        %v1329 = vmul.f32 %v1326, %v1328
        %v1330 = vadd.f32 %v1326, %v1329
        %vm1331 = vweird.f32 %v1314
        %vm1332 = vweird.f32 %v1326
        %vm1333 = vmor %vm1331, %vm1332
        %v1334 = vsel %vm1333, %v1326, %v1330
        %v1335 = vand.u32 2147483647, %v1314
        %vm1336 = vcmp.eq.f32.partialorder %v1335, 8.507059e+37
        %v1337 = vand.u32 %v1314, 2147483648
        %v1338 = vor.u32 1.1754944e-38, %v1337
        %v1339 = vsel %vm1336, %v1338, %v1334
        %v1340 = vmul.f32 1.0, %v1339
        %v1341 = vrcp.pop %v1315
        %v1342 = vmul.f32 %v1315, %v1341
        %v1343 = vsub.f32 1.0, %v1342
        %v1344 = vmul.f32 %v1341, %v1343
        %v1345 = vadd.f32 %v1341, %v1344
        %vm1346 = vweird.f32 %v1315
        %vm1347 = vweird.f32 %v1341
        %vm1348 = vmor %vm1346, %vm1347
        %v1349 = vsel %vm1348, %v1341, %v1345
        %v1350 = vand.u32 2147483647, %v1315
        %vm1351 = vcmp.eq.f32.partialorder %v1350, 8.507059e+37
        %v1352 = vand.u32 %v1315, 2147483648
        %v1353 = vor.u32 1.1754944e-38, %v1352
        %v1354 = vsel %vm1351, %v1353, %v1349
        %v1355 = vmul.f32 1.0, %v1354
        %v1356 = vrcp.pop %v1316
        %v1357 = vmul.f32 %v1316, %v1356
        %v1358 = vsub.f32 1.0, %v1357
        %v1359 = vmul.f32 %v1356, %v1358
        %v1360 = vadd.f32 %v1356, %v1359
        %vm1361 = vweird.f32 %v1316
        %vm1362 = vweird.f32 %v1356
        %vm1363 = vmor %vm1361, %vm1362
        %v1364 = vsel %vm1363, %v1356, %v1360
        %v1365 = vand.u32 2147483647, %v1316
        %vm1366 = vcmp.eq.f32.partialorder %v1365, 8.507059e+37
        %v1367 = vand.u32 %v1316, 2147483648
        %v1368 = vor.u32 1.1754944e-38, %v1367
        %v1369 = vsel %vm1366, %v1368, %v1364
        %v1370 = vmul.f32 1.0, %v1369
        %v1371 = vrcp.pop %v1317
        %v1372 = vmul.f32 %v1317, %v1371
        %v1373 = vsub.f32 1.0, %v1372
        %v1374 = vmul.f32 %v1371, %v1373
        %v1375 = vadd.f32 %v1371, %v1374
        %vm1376 = vweird.f32 %v1317
        %vm1377 = vweird.f32 %v1371
        %vm1378 = vmor %vm1376, %vm1377
        %v1379 = vsel %vm1378, %v1371, %v1375
        %v1380 = vand.u32 2147483647, %v1317
        %vm1381 = vcmp.eq.f32.partialorder %v1380, 8.507059e+37
        %v1382 = vand.u32 %v1317, 2147483648
        %v1383 = vor.u32 1.1754944e-38, %v1382
        %v1384 = vsel %vm1381, %v1383, %v1379
        %v1385 = vmul.f32 1.0, %v1384
        %v1386 = vrcp.pop %v1318
        %v1387 = vmul.f32 %v1318, %v1386
        %v1388 = vsub.f32 1.0, %v1387
        %v1389 = vmul.f32 %v1386, %v1388
        %v1390 = vadd.f32 %v1386, %v1389
        %vm1391 = vweird.f32 %v1318
        %vm1392 = vweird.f32 %v1386
        %vm1393 = vmor %vm1391, %vm1392
        %v1394 = vsel %vm1393, %v1386, %v1390
        %v1395 = vand.u32 2147483647, %v1318
        %vm1396 = vcmp.eq.f32.partialorder %v1395, 8.507059e+37
        %v1397 = vand.u32 %v1318, 2147483648
        %v1398 = vor.u32 1.1754944e-38, %v1397
        %v1399 = vsel %vm1396, %v1398, %v1394
        %v1400 = vmul.f32 1.0, %v1399
        %v1401 = vrcp.pop %v1319
        %v1402 = vmul.f32 %v1319, %v1401
        %v1403 = vsub.f32 1.0, %v1402
        %v1404 = vmul.f32 %v1401, %v1403
        %v1405 = vadd.f32 %v1401, %v1404
        %vm1406 = vweird.f32 %v1319
        %vm1407 = vweird.f32 %v1401
        %vm1408 = vmor %vm1406, %vm1407
        %v1409 = vsel %vm1408, %v1401, %v1405
        %v1410 = vand.u32 2147483647, %v1319
        %vm1411 = vcmp.eq.f32.partialorder %v1410, 8.507059e+37
        %v1412 = vand.u32 %v1319, 2147483648
        %v1413 = vor.u32 1.1754944e-38, %v1412
        %v1414 = vsel %vm1411, %v1413, %v1409
        %v1415 = vmul.f32 1.0, %v1414
        %v1416 = vrcp.pop %v1320
        %v1417 = vmul.f32 %v1320, %v1416
        %v1418 = vsub.f32 1.0, %v1417
        %v1419 = vmul.f32 %v1416, %v1418
        %v1420 = vadd.f32 %v1416, %v1419
        %vm1421 = vweird.f32 %v1320
        %vm1422 = vweird.f32 %v1416
        %vm1423 = vmor %vm1421, %vm1422
        %v1424 = vsel %vm1423, %v1416, %v1420
        %v1425 = vand.u32 2147483647, %v1320
        %vm1426 = vcmp.eq.f32.partialorder %v1425, 8.507059e+37
        %v1427 = vand.u32 %v1320, 2147483648
        %v1428 = vor.u32 1.1754944e-38, %v1427
        %v1429 = vsel %vm1426, %v1428, %v1424
        %v1430 = vmul.f32 1.0, %v1429
        %v1431 = vrcp.pop %v1321
        %v1432 = vmul.f32 %v1321, %v1431
        %v1433 = vsub.f32 1.0, %v1432
        %v1434 = vmul.f32 %v1431, %v1433
        %v1435 = vadd.f32 %v1431, %v1434
        %vm1436 = vweird.f32 %v1321
        %vm1437 = vweird.f32 %v1431
        %vm1438 = vmor %vm1436, %vm1437
        %v1439 = vsel %vm1438, %v1431, %v1435
        %v1440 = vand.u32 2147483647, %v1321
        %vm1441 = vcmp.eq.f32.partialorder %v1440, 8.507059e+37
        %v1442 = vand.u32 %v1321, 2147483648
        %v1443 = vor.u32 1.1754944e-38, %v1442
        %v1444 = vsel %vm1441, %v1443, %v1439
        %v1445 = vmul.f32 1.0, %v1444
        %v1446 = vrcp.pop %v1322
        %v1447 = vmul.f32 %v1322, %v1446
        %v1448 = vsub.f32 1.0, %v1447
        %v1449 = vmul.f32 %v1446, %v1448
        %v1450 = vadd.f32 %v1446, %v1449
        %vm1451 = vweird.f32 %v1322
        %vm1452 = vweird.f32 %v1446
        %vm1453 = vmor %vm1451, %vm1452
        %v1454 = vsel %vm1453, %v1446, %v1450
        %v1455 = vand.u32 2147483647, %v1322
        %vm1456 = vcmp.eq.f32.partialorder %v1455, 8.507059e+37
        %v1457 = vand.u32 %v1322, 2147483648
        %v1458 = vor.u32 1.1754944e-38, %v1457
        %v1459 = vsel %vm1456, %v1458, %v1454
        %v1460 = vmul.f32 1.0, %v1459
        %v1461 = vrcp.pop %v1323
        %v1462 = vmul.f32 %v1323, %v1461
        %v1463 = vsub.f32 1.0, %v1462
        %v1464 = vmul.f32 %v1461, %v1463
        %v1465 = vadd.f32 %v1461, %v1464
        %vm1466 = vweird.f32 %v1323
        %vm1467 = vweird.f32 %v1461
        %vm1468 = vmor %vm1466, %vm1467
        %v1469 = vsel %vm1468, %v1461, %v1465
        %v1470 = vand.u32 2147483647, %v1323
        %vm1471 = vcmp.eq.f32.partialorder %v1470, 8.507059e+37
        %v1472 = vand.u32 %v1323, 2147483648
        %v1473 = vor.u32 1.1754944e-38, %v1472
        %v1474 = vsel %vm1471, %v1473, %v1469
        %v1475 = vmul.f32 1.0, %v1474
        %v1476 = vrcp.pop %v1324
        %v1477 = vmul.f32 %v1324, %v1476
        %v1478 = vsub.f32 1.0, %v1477
        %v1479 = vmul.f32 %v1476, %v1478
        %v1480 = vadd.f32 %v1476, %v1479
        %vm1481 = vweird.f32 %v1324
        %vm1482 = vweird.f32 %v1476
        %vm1483 = vmor %vm1481, %vm1482
        %v1484 = vsel %vm1483, %v1476, %v1480
        %v1485 = vand.u32 2147483647, %v1324
        %vm1486 = vcmp.eq.f32.partialorder %v1485, 8.507059e+37
        %v1487 = vand.u32 %v1324, 2147483648
        %v1488 = vor.u32 1.1754944e-38, %v1487
        %v1489 = vsel %vm1486, %v1488, %v1484
        %v1490 = vmul.f32 1.0, %v1489
        %v1491 = vrcp.pop %v1325
        %v1492 = vmul.f32 %v1325, %v1491
        %v1493 = vsub.f32 1.0, %v1492
        %v1494 = vmul.f32 %v1491, %v1493
        %v1495 = vadd.f32 %v1491, %v1494
        %vm1496 = vweird.f32 %v1325
        %vm1497 = vweird.f32 %v1491
        %vm1498 = vmor %vm1496, %vm1497
        %v1499 = vsel %vm1498, %v1491, %v1495
        %v1500 = vand.u32 2147483647, %v1325
        %vm1501 = vcmp.eq.f32.partialorder %v1500, 8.507059e+37
        %v1502 = vand.u32 %v1325, 2147483648
        %v1503 = vor.u32 1.1754944e-38, %v1502
        %v1504 = vsel %vm1501, %v1503, %v1499
        %v1505 = vmul.f32 1.0, %v1504
        %v1506 = vld [vmem:[%s3] sm:$0x7]
        %1508 = vset.pattern.permute.xlu0 0
        %1509 = vperm.xlu0 %1508, %v1506
        %v1510 = vpop.permute.xlu0 %1509
        %v1512 = vmul.f32 %v1340, %v1510
        %v1513 = vmul.f32 %v1355, %v1510
        %v1514 = vmul.f32 %v1370, %v1510
        %v1515 = vmul.f32 %v1385, %v1510
        %v1516 = vmul.f32 %v1400, %v1510
        %v1517 = vmul.f32 %v1415, %v1510
        %v1518 = vmul.f32 %v1430, %v1510
        %v1519 = vmul.f32 %v1445, %v1510
        %v1520 = vmul.f32 %v1460, %v1510
        %v1521 = vmul.f32 %v1475, %v1510
        %v1522 = vmul.f32 %v1490, %v1510
        %v1523 = vmul.f32 %v1505, %v1510
        %vm1524 = vcmask 1042432
        %v1525 = vsel %vm1524, %v1512, 0.0
        %v1526 = vrot.slane %v1525, 4
        %v1527 = vadd.f32 %v1525, %v1526
        %v1528 = vrot.slane %v1527, 2
        %v1529 = vadd.f32 %v1527, %v1528
        %v1530 = vrot.slane %v1529, 1
        %v1531 = vadd.f32 %v1529, %v1530
        %v1532 = vsel %vm1524, %v1513, 0.0
        %v1533 = vrot.slane %v1532, 4
        %v1534 = vadd.f32 %v1532, %v1533
        %v1535 = vrot.slane %v1534, 2
        %v1536 = vadd.f32 %v1534, %v1535
        %v1537 = vrot.slane %v1536, 1
        %v1538 = vadd.f32 %v1536, %v1537
        %v1539 = vsel %vm1524, %v1514, 0.0
        %v1540 = vrot.slane %v1539, 4
        %v1541 = vadd.f32 %v1539, %v1540
        %v1542 = vrot.slane %v1541, 2
        %v1543 = vadd.f32 %v1541, %v1542
        %v1544 = vrot.slane %v1543, 1
        %v1545 = vadd.f32 %v1543, %v1544
        %v1546 = vsel %vm1524, %v1515, 0.0
        %v1547 = vrot.slane %v1546, 4
        %v1548 = vadd.f32 %v1546, %v1547
        %v1549 = vrot.slane %v1548, 2
        %v1550 = vadd.f32 %v1548, %v1549
        %v1551 = vrot.slane %v1550, 1
        %v1552 = vadd.f32 %v1550, %v1551
        %v1553 = vsel %vm1524, %v1516, 0.0
        %v1554 = vrot.slane %v1553, 4
        %v1555 = vadd.f32 %v1553, %v1554
        %v1556 = vrot.slane %v1555, 2
        %v1557 = vadd.f32 %v1555, %v1556
        %v1558 = vrot.slane %v1557, 1
        %v1559 = vadd.f32 %v1557, %v1558
        %v1560 = vsel %vm1524, %v1517, 0.0
        %v1561 = vrot.slane %v1560, 4
        %v1562 = vadd.f32 %v1560, %v1561
        %v1563 = vrot.slane %v1562, 2
        %v1564 = vadd.f32 %v1562, %v1563
        %v1565 = vrot.slane %v1564, 1
        %v1566 = vadd.f32 %v1564, %v1565
        %v1567 = vsel %vm1524, %v1518, 0.0
        %v1568 = vrot.slane %v1567, 4
        %v1569 = vadd.f32 %v1567, %v1568
        %v1570 = vrot.slane %v1569, 2
        %v1571 = vadd.f32 %v1569, %v1570
        %v1572 = vrot.slane %v1571, 1
        %v1573 = vadd.f32 %v1571, %v1572
        %v1574 = vsel %vm1524, %v1519, 0.0
        %v1575 = vrot.slane %v1574, 4
        %v1576 = vadd.f32 %v1574, %v1575
        %v1577 = vrot.slane %v1576, 2
        %v1578 = vadd.f32 %v1576, %v1577
        %v1579 = vrot.slane %v1578, 1
        %v1580 = vadd.f32 %v1578, %v1579
        %v1581 = vsel %vm1524, %v1520, 0.0
        %v1582 = vrot.slane %v1581, 4
        %v1583 = vadd.f32 %v1581, %v1582
        %v1584 = vrot.slane %v1583, 2
        %v1585 = vadd.f32 %v1583, %v1584
        %v1586 = vrot.slane %v1585, 1
        %v1587 = vadd.f32 %v1585, %v1586
        %v1588 = vsel %vm1524, %v1521, 0.0
        %v1589 = vrot.slane %v1588, 4
        %v1590 = vadd.f32 %v1588, %v1589
        %v1591 = vrot.slane %v1590, 2
        %v1592 = vadd.f32 %v1590, %v1591
        %v1593 = vrot.slane %v1592, 1
        %v1594 = vadd.f32 %v1592, %v1593
        %v1595 = vsel %vm1524, %v1522, 0.0
        %v1596 = vrot.slane %v1595, 4
        %v1597 = vadd.f32 %v1595, %v1596
        %v1598 = vrot.slane %v1597, 2
        %v1599 = vadd.f32 %v1597, %v1598
        %v1600 = vrot.slane %v1599, 1
        %v1601 = vadd.f32 %v1599, %v1600
        %v1602 = vsel %vm1524, %v1523, 0.0
        %v1603 = vrot.slane %v1602, 4
        %v1604 = vadd.f32 %v1602, %v1603
        %v1605 = vrot.slane %v1604, 2
        %v1606 = vadd.f32 %v1604, %v1605
        %v1607 = vrot.slane %v1606, 1
        %v1608 = vadd.f32 %v1606, %v1607
        %s1609 = sld [smem:[#allocation2]]
        %v1610 = vstv %s1609
        %v1611 = vadd.f32 %v1531, %v1610
        %v1612 = vadd.f32 %v1538, %v1610
        %v1613 = vadd.f32 %v1545, %v1610
        %v1614 = vadd.f32 %v1552, %v1610
        %v1615 = vadd.f32 %v1559, %v1610
        %v1616 = vadd.f32 %v1566, %v1610
        %v1617 = vadd.f32 %v1573, %v1610
        %v1618 = vadd.f32 %v1580, %v1610
        %v1619 = vadd.f32 %v1587, %v1610
        %v1620 = vadd.f32 %v1594, %v1610
        %v1621 = vadd.f32 %v1601, %v1610
        %v1622 = vadd.f32 %v1608, %v1610
        %v1623 = vxor.u32 %v1611, 2147483648
        %v1624 = vxor.u32 %v1612, 2147483648
        %v1625 = vxor.u32 %v1613, 2147483648
        %v1626 = vxor.u32 %v1614, 2147483648
        %v1627 = vxor.u32 %v1615, 2147483648
        %v1628 = vxor.u32 %v1616, 2147483648
        %v1629 = vxor.u32 %v1617, 2147483648
        %v1630 = vxor.u32 %v1618, 2147483648
        %v1631 = vxor.u32 %v1619, 2147483648
        %v1632 = vxor.u32 %v1620, 2147483648
        %v1633 = vxor.u32 %v1621, 2147483648
        %v1634 = vxor.u32 %v1622, 2147483648
        %v1635 = vmul.f32 %v1623, 1.442695
        %v1636 = vpow.pop %v1635
        %v1637 = vmul.f32 %v1624, 1.442695
        %v1638 = vpow.pop %v1637
        %v1639 = vmul.f32 %v1625, 1.442695
        %v1640 = vpow.pop %v1639
        %v1641 = vmul.f32 %v1626, 1.442695
        %v1642 = vpow.pop %v1641
        %v1643 = vmul.f32 %v1627, 1.442695
        %v1644 = vpow.pop %v1643
        %v1645 = vmul.f32 %v1628, 1.442695
        %v1646 = vpow.pop %v1645
        %v1647 = vmul.f32 %v1629, 1.442695
        %v1648 = vpow.pop %v1647
        %v1649 = vmul.f32 %v1630, 1.442695
        %v1650 = vpow.pop %v1649
        %v1651 = vmul.f32 %v1631, 1.442695
        %v1652 = vpow.pop %v1651
        %v1653 = vmul.f32 %v1632, 1.442695
        %v1654 = vpow.pop %v1653
        %v1655 = vmul.f32 %v1633, 1.442695
        %v1656 = vpow.pop %v1655
        %v1657 = vmul.f32 %v1634, 1.442695
        %v1658 = vpow.pop %v1657
        %v1659 = vadd.f32 %v1636, 1.0
        %v1660 = vadd.f32 %v1638, 1.0
        %v1661 = vadd.f32 %v1640, 1.0
        %v1662 = vadd.f32 %v1642, 1.0
        %v1663 = vadd.f32 %v1644, 1.0
        %v1664 = vadd.f32 %v1646, 1.0
        %v1665 = vadd.f32 %v1648, 1.0
        %v1666 = vadd.f32 %v1650, 1.0
        %v1667 = vadd.f32 %v1652, 1.0
        %v1668 = vadd.f32 %v1654, 1.0
        %v1669 = vadd.f32 %v1656, 1.0
        %v1670 = vadd.f32 %v1658, 1.0
        %v1671 = vrcp.pop %v1659
        %v1672 = vmul.f32 %v1659, %v1671
        %v1673 = vsub.f32 1.0, %v1672
        %v1674 = vmul.f32 %v1671, %v1673
        %v1675 = vadd.f32 %v1671, %v1674
        %vm1676 = vweird.f32 %v1659
        %vm1677 = vweird.f32 %v1671
        %vm1678 = vmor %vm1676, %vm1677
        %v1679 = vsel %vm1678, %v1671, %v1675
        %v1680 = vand.u32 2147483647, %v1659
        %vm1681 = vcmp.eq.f32.partialorder %v1680, 8.507059e+37
        %v1682 = vand.u32 %v1659, 2147483648
        %v1683 = vor.u32 1.1754944e-38, %v1682
        %v1684 = vsel %vm1681, %v1683, %v1679
        %v1685 = vmul.f32 1.0, %v1684
        %v1686 = vrcp.pop %v1660
        %v1687 = vmul.f32 %v1660, %v1686
        %v1688 = vsub.f32 1.0, %v1687
        %v1689 = vmul.f32 %v1686, %v1688
        %v1690 = vadd.f32 %v1686, %v1689
        %vm1691 = vweird.f32 %v1660
        %vm1692 = vweird.f32 %v1686
        %vm1693 = vmor %vm1691, %vm1692
        %v1694 = vsel %vm1693, %v1686, %v1690
        %v1695 = vand.u32 2147483647, %v1660
        %vm1696 = vcmp.eq.f32.partialorder %v1695, 8.507059e+37
        %v1697 = vand.u32 %v1660, 2147483648
        %v1698 = vor.u32 1.1754944e-38, %v1697
        %v1699 = vsel %vm1696, %v1698, %v1694
        %v1700 = vmul.f32 1.0, %v1699
        %v1701 = vrcp.pop %v1661
        %v1702 = vmul.f32 %v1661, %v1701
        %v1703 = vsub.f32 1.0, %v1702
        %v1704 = vmul.f32 %v1701, %v1703
        %v1705 = vadd.f32 %v1701, %v1704
        %vm1706 = vweird.f32 %v1661
        %vm1707 = vweird.f32 %v1701
        %vm1708 = vmor %vm1706, %vm1707
        %v1709 = vsel %vm1708, %v1701, %v1705
        %v1710 = vand.u32 2147483647, %v1661
        %vm1711 = vcmp.eq.f32.partialorder %v1710, 8.507059e+37
        %v1712 = vand.u32 %v1661, 2147483648
        %v1713 = vor.u32 1.1754944e-38, %v1712
        %v1714 = vsel %vm1711, %v1713, %v1709
        %v1715 = vmul.f32 1.0, %v1714
        %v1716 = vrcp.pop %v1662
        %v1717 = vmul.f32 %v1662, %v1716
        %v1718 = vsub.f32 1.0, %v1717
        %v1719 = vmul.f32 %v1716, %v1718
        %v1720 = vadd.f32 %v1716, %v1719
        %vm1721 = vweird.f32 %v1662
        %vm1722 = vweird.f32 %v1716
        %vm1723 = vmor %vm1721, %vm1722
        %v1724 = vsel %vm1723, %v1716, %v1720
        %v1725 = vand.u32 2147483647, %v1662
        %vm1726 = vcmp.eq.f32.partialorder %v1725, 8.507059e+37
        %v1727 = vand.u32 %v1662, 2147483648
        %v1728 = vor.u32 1.1754944e-38, %v1727
        %v1729 = vsel %vm1726, %v1728, %v1724
        %v1730 = vmul.f32 1.0, %v1729
        %v1731 = vrcp.pop %v1663
        %v1732 = vmul.f32 %v1663, %v1731
        %v1733 = vsub.f32 1.0, %v1732
        %v1734 = vmul.f32 %v1731, %v1733
        %v1735 = vadd.f32 %v1731, %v1734
        %vm1736 = vweird.f32 %v1663
        %vm1737 = vweird.f32 %v1731
        %vm1738 = vmor %vm1736, %vm1737
        %v1739 = vsel %vm1738, %v1731, %v1735
        %v1740 = vand.u32 2147483647, %v1663
        %vm1741 = vcmp.eq.f32.partialorder %v1740, 8.507059e+37
        %v1742 = vand.u32 %v1663, 2147483648
        %v1743 = vor.u32 1.1754944e-38, %v1742
        %v1744 = vsel %vm1741, %v1743, %v1739
        %v1745 = vmul.f32 1.0, %v1744
        %v1746 = vrcp.pop %v1664
        %v1747 = vmul.f32 %v1664, %v1746
        %v1748 = vsub.f32 1.0, %v1747
        %v1749 = vmul.f32 %v1746, %v1748
        %v1750 = vadd.f32 %v1746, %v1749
        %vm1751 = vweird.f32 %v1664
        %vm1752 = vweird.f32 %v1746
        %vm1753 = vmor %vm1751, %vm1752
        %v1754 = vsel %vm1753, %v1746, %v1750
        %v1755 = vand.u32 2147483647, %v1664
        %vm1756 = vcmp.eq.f32.partialorder %v1755, 8.507059e+37
        %v1757 = vand.u32 %v1664, 2147483648
        %v1758 = vor.u32 1.1754944e-38, %v1757
        %v1759 = vsel %vm1756, %v1758, %v1754
        %v1760 = vmul.f32 1.0, %v1759
        %v1761 = vrcp.pop %v1665
        %v1762 = vmul.f32 %v1665, %v1761
        %v1763 = vsub.f32 1.0, %v1762
        %v1764 = vmul.f32 %v1761, %v1763
        %v1765 = vadd.f32 %v1761, %v1764
        %vm1766 = vweird.f32 %v1665
        %vm1767 = vweird.f32 %v1761
        %vm1768 = vmor %vm1766, %vm1767
        %v1769 = vsel %vm1768, %v1761, %v1765
        %v1770 = vand.u32 2147483647, %v1665
        %vm1771 = vcmp.eq.f32.partialorder %v1770, 8.507059e+37
        %v1772 = vand.u32 %v1665, 2147483648
        %v1773 = vor.u32 1.1754944e-38, %v1772
        %v1774 = vsel %vm1771, %v1773, %v1769
        %v1775 = vmul.f32 1.0, %v1774
        %v1776 = vrcp.pop %v1666
        %v1777 = vmul.f32 %v1666, %v1776
        %v1778 = vsub.f32 1.0, %v1777
        %v1779 = vmul.f32 %v1776, %v1778
        %v1780 = vadd.f32 %v1776, %v1779
        %vm1781 = vweird.f32 %v1666
        %vm1782 = vweird.f32 %v1776
        %vm1783 = vmor %vm1781, %vm1782
        %v1784 = vsel %vm1783, %v1776, %v1780
        %v1785 = vand.u32 2147483647, %v1666
        %vm1786 = vcmp.eq.f32.partialorder %v1785, 8.507059e+37
        %v1787 = vand.u32 %v1666, 2147483648
        %v1788 = vor.u32 1.1754944e-38, %v1787
        %v1789 = vsel %vm1786, %v1788, %v1784
        %v1790 = vmul.f32 1.0, %v1789
        %v1791 = vrcp.pop %v1667
        %v1792 = vmul.f32 %v1667, %v1791
        %v1793 = vsub.f32 1.0, %v1792
        %v1794 = vmul.f32 %v1791, %v1793
        %v1795 = vadd.f32 %v1791, %v1794
        %vm1796 = vweird.f32 %v1667
        %vm1797 = vweird.f32 %v1791
        %vm1798 = vmor %vm1796, %vm1797
        %v1799 = vsel %vm1798, %v1791, %v1795
        %v1800 = vand.u32 2147483647, %v1667
        %vm1801 = vcmp.eq.f32.partialorder %v1800, 8.507059e+37
        %v1802 = vand.u32 %v1667, 2147483648
        %v1803 = vor.u32 1.1754944e-38, %v1802
        %v1804 = vsel %vm1801, %v1803, %v1799
        %v1805 = vmul.f32 1.0, %v1804
        %v1806 = vrcp.pop %v1668
        %v1807 = vmul.f32 %v1668, %v1806
        %v1808 = vsub.f32 1.0, %v1807
        %v1809 = vmul.f32 %v1806, %v1808
        %v1810 = vadd.f32 %v1806, %v1809
        %vm1811 = vweird.f32 %v1668
        %vm1812 = vweird.f32 %v1806
        %vm1813 = vmor %vm1811, %vm1812
        %v1814 = vsel %vm1813, %v1806, %v1810
        %v1815 = vand.u32 2147483647, %v1668
        %vm1816 = vcmp.eq.f32.partialorder %v1815, 8.507059e+37
        %v1817 = vand.u32 %v1668, 2147483648
        %v1818 = vor.u32 1.1754944e-38, %v1817
        %v1819 = vsel %vm1816, %v1818, %v1814
        %v1820 = vmul.f32 1.0, %v1819
        %v1821 = vrcp.pop %v1669
        %v1822 = vmul.f32 %v1669, %v1821
        %v1823 = vsub.f32 1.0, %v1822
        %v1824 = vmul.f32 %v1821, %v1823
        %v1825 = vadd.f32 %v1821, %v1824
        %vm1826 = vweird.f32 %v1669
        %vm1827 = vweird.f32 %v1821
        %vm1828 = vmor %vm1826, %vm1827
        %v1829 = vsel %vm1828, %v1821, %v1825
        %v1830 = vand.u32 2147483647, %v1669
        %vm1831 = vcmp.eq.f32.partialorder %v1830, 8.507059e+37
        %v1832 = vand.u32 %v1669, 2147483648
        %v1833 = vor.u32 1.1754944e-38, %v1832
        %v1834 = vsel %vm1831, %v1833, %v1829
        %v1835 = vmul.f32 1.0, %v1834
        %v1836 = vrcp.pop %v1670
        %v1837 = vmul.f32 %v1670, %v1836
        %v1838 = vsub.f32 1.0, %v1837
        %v1839 = vmul.f32 %v1836, %v1838
        %v1840 = vadd.f32 %v1836, %v1839
        %vm1841 = vweird.f32 %v1670
        %vm1842 = vweird.f32 %v1836
        %vm1843 = vmor %vm1841, %vm1842
        %v1844 = vsel %vm1843, %v1836, %v1840
        %v1845 = vand.u32 2147483647, %v1670
        %vm1846 = vcmp.eq.f32.partialorder %v1845, 8.507059e+37
        %v1847 = vand.u32 %v1670, 2147483648
        %v1848 = vor.u32 1.1754944e-38, %v1847
        %v1849 = vsel %vm1846, %v1848, %v1844
        %v1850 = vmul.f32 1.0, %v1849
        %s1851 = sld [smem:[#allocation2 + $0x1]]
        %v1852 = vstv %s1851
        %v1853 = vmul.f32 %v1685, %v1852
        %v1854 = vmul.f32 %v1700, %v1852
        %v1855 = vmul.f32 %v1715, %v1852
        %v1856 = vmul.f32 %v1730, %v1852
        %v1857 = vmul.f32 %v1745, %v1852
        %v1858 = vmul.f32 %v1760, %v1852
        %v1859 = vmul.f32 %v1775, %v1852
        %v1860 = vmul.f32 %v1790, %v1852
        %v1861 = vmul.f32 %v1805, %v1852
        %v1862 = vmul.f32 %v1820, %v1852
        %v1863 = vmul.f32 %v1835, %v1852
        %v1864 = vmul.f32 %v1850, %v1852
        %s1865 = sld [smem:[#allocation2 + $0x2]]
        %v1866 = vstv %s1865
        %v1867 = vadd.f32 %v1853, %v1866
        %v1868 = vadd.f32 %v1854, %v1866
        %v1869 = vadd.f32 %v1855, %v1866
        %v1870 = vadd.f32 %v1856, %v1866
        %v1871 = vadd.f32 %v1857, %v1866
        %v1872 = vadd.f32 %v1858, %v1866
        %v1873 = vadd.f32 %v1859, %v1866
        %v1874 = vadd.f32 %v1860, %v1866
        %v1875 = vadd.f32 %v1861, %v1866
        %v1876 = vadd.f32 %v1862, %v1866
        %v1877 = vadd.f32 %v1863, %v1866
        %v1878 = vadd.f32 %v1864, %v1866
        %v1891 = vrot.slane %v1868, 7
        %v1892 = vrot.slane %v1869, 6
        %v1893 = vrot.slane %v1870, 5
        %v1894 = vrot.slane %v1871, 4
        %v1895 = vrot.slane %v1872, 3
        %v1896 = vrot.slane %v1873, 2
        %v1897 = vrot.slane %v1874, 1
        %v1898 = vrot.slane %v1876, 7
        %v1899 = vrot.slane %v1877, 6
        %v1900 = vrot.slane %v1878, 5
        %vm1901 = vcmask 1040384
        %v1902 = vsel %vm1901, %v1867, %v1891
        %vm1903 = vcmask 1042434
        %v1904 = vsel %vm1903, %v1892, %v1893
        %vm1905 = vcmask 1041408
        %v1906 = vsel %vm1905, %v1902, %v1904
        %vm1907 = vcmask 1044484
        %v1908 = vsel %vm1907, %v1894, %v1895
        %vm1909 = vcmask 1046534
        %v1910 = vsel %vm1909, %v1896, %v1897
        %vm1911 = vcmask 1045508
        %v1912 = vsel %vm1911, %v1908, %v1910
        %vm1913 = vcmask 1043456
        %v1914 = vsel %vm1913, %v1906, %v1912
        %v1915 = vsel %vm1901, %v1875, %v1898
        %v1916 = vsel %vm1903, %v1899, %v1900
        %v1917 = vsel %vm1905, %v1915, %v1916
        %1920 = vst [vmem:[%s244] sm:$0xff] %v1914
        %v1921 = vlaneseq
        %vm1922 = vcmp.ge.s32.totalorder %v1921, 0
        %vm1923 = vcmp.lt.s32.totalorder %v1921, 512
        %vm1924 = vmand %vm1922, %vm1923
        %1925 = vst.msk [vmem:[%s244 + $0x8] sm:$0xf] %vm1924, %v1917
        %s1926 = sand.u32 %s138, 1
        %s1927 = scalar_lea.sflag [#allocation3], %s1926
        %s1928 = sand.u32 %s138, 1
        %s1929 = smul.addr %s1928, 12
        %s1930 = scalar_lea.vmem [#allocation5], %s1929
        // Predicated region
        $region45: #{torch_nrf_forward.1} parent=39 // pred_check
          %p1931 = pneg %p148
        $region46: #{torch_nrf_forward.1} parent=39 // pred_check_branch
          %1933 = sbr.rel (%p1931) target = $region48
        $region47: #{torch_nrf_forward.1} parent=39 // pred_region
          %1935 = vsyncadd %s1927, 0
          %s1936 = smul.addr %s20, 12
          %s1937 = scalar_lea.hbm %s5, %s1936
          %s1939 = sshll.u32 %s1930, 4
          %s1940 = int_to_ptr.vmem [resolvable:$true] %s1939
          %s1941 = sshll.u32 %s1937, 4
          %s1942 = int_to_ptr.hbm [resolvable:$true] %s1941
          %1944 = dma.vmem_to_hbm [thread:$0]  %s1940, 192, %s1942, %s1927
        $region48: #{torch_nrf_forward.1} parent=39 // pred_fallthru
          _
      $region40: #{torch_nrf_forward.1} parent=5 // pred_fallthru
        _
      %p1945 = scmp.le.s32.totalorder 2, %s15
      // Predicated region
      $region49: #{torch_nrf_forward.1} parent=5 // pred_check
        %p1946 = pneg %p1945
      $region50: #{torch_nrf_forward.1} parent=5 // pred_check_branch
        %1948 = sbr.rel (%p1946) target = $region52
      $region51: #{torch_nrf_forward.1} parent=5 // pred_region
        %s1949 = ssub.s32 %s15, 2
        // Predicated region
        $region53: #{torch_nrf_forward.1} parent=51 // pred_check
          %p1950 = pneg %p154
        $region54: #{torch_nrf_forward.1} parent=51 // pred_check_branch
          %1952 = sbr.rel (%p1950) target = $region56
        $region55: #{torch_nrf_forward.1} parent=51 // pred_region
          %s1953 = sand.u32 %s139, 1
          %s1954 = scalar_lea.sflag [#allocation3], %s1953
          %s1955 = sand.u32 %s139, 1
          %s1956 = smul.addr %s1955, 12
          %s1957 = scalar_lea.vmem [#allocation5], %s1956
          %1959 = dma.done %s1954, 192
        $region56: #{torch_nrf_forward.1} parent=51 // pred_fallthru
          _
      $region52: #{torch_nrf_forward.1} parent=5 // pred_fallthru
        _
    $region6: #{torch_nrf_forward.1} parent=1 // loop_footer
      %s19 = sadd.s32 1, %s15
    $region7: #{torch_nrf_forward.1} parent=1 // loop_footer_branch
      %14 = sbr.rel target = $region3
    $region8: #{torch_nrf_forward.1} parent=1 // loop_exit
      _
    %1960 = vsyncpa [#allocation3], 1
    %s1961 = scalar_lea.sflag [#allocation3], 1
    %1962 = vsyncpa %s1961, 1
    %1963 = vsyncpa [#allocation4], 1
    %s1964 = scalar_lea.sflag [#allocation4], 1
    %1965 = vsyncpa %s1964, 1

</llo_original>
